<compile_context>
chip_gen: v7x
topology: tpu7x:2x2x1
jax: 0.10.0
libtpu: 0.0.40
codegen_flags: <defaults>
</compile_context>

<pallas_src>
import functools

import jax
import jax.numpy as jnp
from jax.experimental import pallas as pl
from jax.experimental.pallas import tpu as pltpu

STATE_DIM = 3                                                  # D
HIDDEN = 32                                                    # H
DNN_LAYERS = (STATE_DIM + 1, HIDDEN, HIDDEN, STATE_DIM - 2)    # args.layers     -> [4, 32, 32, 1]
GRU_LAYERS = (STATE_DIM, HIDDEN, STATE_DIM)                    # args.GRU_layers -> [3, 32, 3]
DT = 0.01                                                      # args.dt
M_TILE_MAX = 4096                                              # max lane tile (sweep 2048-4096)
LANE_UNIT = 256                                                # tile granularity (MXU free dim)
MXU_DTYPE = jnp.float32   # set to jnp.bfloat16 on v6e/v7x after re-validating tolerances


# ----------------------------- Pallas kernel --------------------------------
def _rk4_gru_kernel(inp_ref, w1g_ref, b1g_ref, w2g_ref, b2g_ref,
                    dw1t_ref, db1_ref, dw2t_ref, db2_ref, dw3c_ref, db3_ref,
                    out_ref, *, dt):
    H = dw2t_ref.shape[0]
    Mt = inp_ref.shape[1]

    x = inp_ref[...]                       # (5, Mt): rows 0-2 svi, row 3 exci, row 4 excj
    svi = x[0:3, :]
    s0, s1, s2 = x[0:1, :], x[1:2, :], x[2:3, :]
    exci, excj = x[3:4, :], x[4:5, :]
    exch = 0.5 * (exci + excj)

    # ---- fused GRU gates (2 MXU pushes); output rows 0-2: r, rows 8-10: z ----
    hg = jnp.maximum(
        jnp.dot(w1g_ref[...].astype(MXU_DTYPE), svi.astype(MXU_DTYPE),
                preferred_element_type=jnp.float32) + b1g_ref[...], 0.0)        # (2H, Mt)
    gates = jax.nn.sigmoid(
        jnp.dot(w2g_ref[...].astype(MXU_DTYPE), hg.astype(MXU_DTYPE),
                preferred_element_type=jnp.float32) + b2g_ref[...])             # (16, Mt)
    r = gates[0:3, :]                      # 8-sublane aligned -> free view
    z = gates[8:11, :]
    z0, z1, z2 = gates[8:9, :], gates[9:10, :], gates[10:11, :]

    # reset-gated state, carried row-wise (no concat / re-slice on the RK4 chain)
    a0 = gates[0:1, :] * s0
    a1 = gates[1:2, :] * s1
    a2 = gates[2:3, :] * s2

    # ---- dynamics-MLP weights, broadcast ONCE per tile (no broadcast CSE in JAX) ----
    dw1t = dw1t_ref[...]                                   # (H, D+1)
    wc0 = jnp.broadcast_to(dw1t[:, 0:1], (H, Mt))
    wc1 = jnp.broadcast_to(dw1t[:, 1:2], (H, Mt))
    wc2 = jnp.broadcast_to(dw1t[:, 2:3], (H, Mt))
    wex = jnp.broadcast_to(dw1t[:, 3:4], (H, Mt))
    b1b = jnp.broadcast_to(db1_ref[...], (H, Mt))
    b2b = jnp.broadcast_to(db2_ref[...], (H, Mt))
    w3b = jnp.broadcast_to(dw3c_ref[...], (H, Mt))
    b3b = jnp.broadcast_to(db3_ref[...], (1, Mt))
    dw2t = dw2t_ref[...].astype(MXU_DTYPE)                 # (H, H)

    def dnn_row(k0, k1_, k2_, extra):
        # layer 1 (K<=4): VPU broadcast MACs -> keeps the serial chain off the MXU
        h = jnp.maximum(wc0 * k0 + wc1 * k1_ + wc2 * k2_ + wex * extra + b1b, 0.0)
        # layer 2 (HxH): MXU
        h = jnp.maximum(
            jnp.dot(dw2t, h.astype(MXU_DTYPE),
                    preferred_element_type=jnp.float32) + b2b, 0.0)
        # layer 3 (single output row): VPU multiply + sublane-sum (XLU) instead of
        # an MXU push/drain round trip per RK4 stage
        return jnp.sum(w3b * h, axis=0, keepdims=True) + b3b                   # (1, Mt)

    def k_rows(k0, k1_, k2_, svexc):
        extra = -k2_ - svexc
        return k1_, extra, dnn_row(k0, k1_, k2_, extra)

    # ---- RK4, state carried as three (1, Mt) rows ----
    k1a, k1b, k1c = k_rows(a0, a1, a2, exci)
    hdt = dt / 2.0
    k2a, k2b, k2c = k_rows(a0 + hdt * k1a, a1 + hdt * k1b, a2 + hdt * k1c, exch)
    k3a, k3b, k3c = k_rows(a0 + hdt * k2a, a1 + hdt * k2b, a2 + hdt * k2c, exch)
    k4a, k4b, k4c = k_rows(a0 + dt * k3a, a1 + dt * k3b, a2 + dt * k3c, excj)
    c = dt / 6.0
    svj0 = a0 + c * (k1a + 2.0 * k2a + 2.0 * k3a + k4a)
    svj1 = a1 + c * (k1b + 2.0 * k2b + 2.0 * k3b + k4b)
    svj2 = a2 + c * (k1c + 2.0 * k2c + 2.0 * k3c + k4c)

    o0 = z0 * svj0 + (1.0 - z0) * s0
    o1 = z1 * svj1 + (1.0 - z1) * s1
    o2 = z2 * svj2 + (1.0 - z2) * s2

    # single fused, lane-dense store: rows 0-2 svj_z, rows 3-5 r, rows 6-8 z
    out_ref[...] = jnp.concatenate([o0, o1, o2, r, z], axis=0)


# ------------------------------- wrapper -------------------------------------
def _pick_m_tile(M, m_tile_max=M_TILE_MAX, unit=LANE_UNIT):
    t = min(m_tile_max, unit * pl.cdiv(M, unit))       # no bigger than the padded problem
    if M > 2 * unit:                                   # keep >= 2 grid steps (v7x megacore)
        t = min(t, unit * pl.cdiv(M, 2 * unit))
    return max(unit, t)


def rk4_gru_cell(SVi, exci, excj, params, dt=DT, m_tile=None):
    # TODO(synk): when called inside a time-step scan, keep activations in the
    # (feat, M) layout persistently (transpose/pad once outside the loop) and
    # drop the per-call layout plumbing below.
    B, T, D = SVi.shape
    H = GRU_LAYERS[1]
    M = B * T
    if m_tile is None:
        m_tile = _pick_m_tile(M)
    M_pad = pl.cdiv(M, m_tile) * m_tile
    pad = M_pad - M

    # fused input slab (5, M): rows 0-2 svi, row 3 exci, row 4 excj
    inp = jnp.concatenate(
        [SVi.reshape(M, D).T, exci.reshape(M, 1).T, excj.reshape(M, 1).T],
        axis=0).astype(jnp.float32)
    if pad:
        inp = jnp.pad(inp, ((0, 0), (0, pad)))

    # fused gate weights (trace-time layout plumbing, mathematically identical).
    # Second gate layer is (16, 2H) with r in rows 0-2 and z in rows 8-10 so the
    # in-kernel slices are 8-sublane aligned free views.
    w1g = jnp.concatenate([params["rw1"].T, params["uw1"].T], axis=0)           # (2H, D)
    b1g = jnp.concatenate([params["rb1"].T, params["ub1"].T], axis=0)           # (2H, 1)
    w2g = jnp.zeros((16, 2 * H), jnp.float32)
    w2g = w2g.at[0:D, 0:H].set(params["rw2"].T).at[8:8 + D, H:].set(params["uw2"].T)
    b2g = jnp.zeros((16, 1), jnp.float32)
    b2g = b2g.at[0:D, :].set(params["rb2"].T).at[8:8 + D, :].set(params["ub2"].T)

    dw1t = params["dw1"].T          # (H, D+1)
    db1 = params["db1"].T           # (H, 1)
    dw2t = params["dw2"].T          # (H, H)
    db2 = params["db2"].T           # (H, 1)
    dw3c = params["dw3"]            # (H, 1)  -- column for the VPU multiply + sublane sum
    db3 = params["db3"]             # (1, 1)
    weights = (w1g, b1g, w2g, b2g, dw1t, db1, dw2t, db2, dw3c, db3)

    grid = (M_pad // m_tile,)
    w_spec = lambda a: pl.BlockSpec(a.shape, lambda i: (0, 0))   # VMEM-resident across grid

    flops_per_col = (2 * D * 2 * H + 2 * 2 * H * 16                 # fused gates
                     + 4 * (2 * (D + 1) * H + 2 * H * H + 2 * H))   # 4 RK4 stages
    cost = pl.CostEstimate(
        flops=int(flops_per_col) * M_pad,
        transcendentals=2 * 2 * D * M_pad,
        bytes_accessed=4 * (14 * M_pad + sum(int(w.size) for w in weights)))

    out = pl.pallas_call(
        functools.partial(_rk4_gru_kernel, dt=dt),
        out_shape=jax.ShapeDtypeStruct((9, M_pad), jnp.float32),
        grid=grid,
        in_specs=[pl.BlockSpec((5, m_tile), lambda i: (0, i))]
                 + [w_spec(w) for w in weights],
        out_specs=pl.BlockSpec((9, m_tile), lambda i: (0, i)),
        compiler_params=pltpu.CompilerParams(
            dimension_semantics=("parallel",),
            vmem_limit_bytes=32 * 1024 * 1024),
        cost_estimate=cost,
    )(inp, *weights)

    out = out[:, :M]
    svj_z = out[0:3, :].T.reshape(B, T, D)
    r = out[3:6, :].T.reshape(B, T, D)
    z = out[6:9, :].T.reshape(B, T, D)
    return svj_z, r, z


# ---------------------- deterministic parameter init -------------------------
def _init_linear(key, fan_in, fan_out):
    k1, k2 = jax.random.split(key)
    bound = 1.0 / jnp.sqrt(jnp.asarray(fan_in, jnp.float32))
    w = jax.random.uniform(k1, (fan_in, fan_out), jnp.float32, -bound, bound)
    b = jax.random.uniform(k2, (1, fan_out), jnp.float32, -bound, bound)
    return w, b


def init_params(key):
    ks = jax.random.split(key, 7)
    rw1, rb1 = _init_linear(ks[0], GRU_LAYERS[0], GRU_LAYERS[1])
    rw2, rb2 = _init_linear(ks[1], GRU_LAYERS[1], GRU_LAYERS[2])
    uw1, ub1 = _init_linear(ks[2], GRU_LAYERS[0], GRU_LAYERS[1])
    uw2, ub2 = _init_linear(ks[3], GRU_LAYERS[1], GRU_LAYERS[2])
    dw1, db1 = _init_linear(ks[4], DNN_LAYERS[0], DNN_LAYERS[1])
    dw2, db2 = _init_linear(ks[5], DNN_LAYERS[1], DNN_LAYERS[2])
    dw3, db3 = _init_linear(ks[6], DNN_LAYERS[2], DNN_LAYERS[3])   # lastbias=True
    return dict(rw1=rw1, rb1=rb1, rw2=rw2, rb2=rb2,
                uw1=uw1, ub1=ub1, uw2=uw2, ub2=ub2,
                dw1=dw1, db1=db1, dw2=dw2, db2=db2, dw3=dw3, db3=db3)


# ------------------------- pure-JAX reference (torch semantics) --------------
def reference(SVi, exci, excj, p, dt=DT):
    def mlp2(x, w1, b1, w2, b2):
        return jnp.maximum(x @ w1 + b1, 0.0) @ w2 + b2

    def dnn(x):
        h = jnp.maximum(x @ p["dw1"] + p["db1"], 0.0)
        h = jnp.maximum(h @ p["dw2"] + p["db2"], 0.0)
        return h @ p["dw3"] + p["db3"]

    exch = 0.5 * (exci + excj)
    r = jax.nn.sigmoid(mlp2(SVi, p["rw1"], p["rb1"], p["rw2"], p["rb2"]))
    z = jax.nn.sigmoid(mlp2(SVi, p["uw1"], p["ub1"], p["uw2"], p["ub2"]))
    svi_r = r * SVi

    def k_fn(svk, svexc):
        extra = -svk[..., 2:3] - svexc
        return jnp.concatenate(
            [svk[..., 1:2], extra, dnn(jnp.concatenate([svk, extra], -1))], -1)

    k1 = k_fn(svi_r, exci)
    k2 = k_fn(svi_r + dt / 2 * k1, exch)
    k3 = k_fn(svi_r + dt / 2 * k2, exch)
    k4 = k_fn(svi_r + dt * k3, excj)
    svj = svi_r + dt / 6 * (k1 + 2 * k2 + 2 * k3 + k4)
    return z * svj + (1 - z) * SVi, r, z


# ----------------------------------- main -------------------------------------
if __name__ == "__main__":
    key = jax.random.PRNGKey(0)
    kp, k1, k2, k3 = jax.random.split(key, 4)

    B, T = 2, 8
    SVi = jax.random.normal(k1, (B, T, STATE_DIM), jnp.float32)
    exci = jax.random.normal(k2, (B, T, 1), jnp.float32)
    excj = jax.random.normal(k3, (B, T, 1), jnp.float32)

    params = init_params(kp)

    svj_z, r, z = rk4_gru_cell(SVi, exci, excj, params, DT)
    jax.block_until_ready((svj_z, r, z))

    ref_svj, ref_r, ref_z = reference(SVi, exci, excj, params, DT)
    assert jnp.allclose(svj_z, ref_svj, rtol=1e-3, atol=1e-4), "SVj mismatch"
    assert jnp.allclose(r, ref_r, rtol=1e-3, atol=1e-4), "r mismatch"
    assert jnp.allclose(z, ref_z, rtol=1e-3, atol=1e-4), "z mismatch"

    print("KERNEL_OK")
</pallas_src>

<mosaic_0001>
module attributes {stable_mosaic.version = 11 : i64} {
  func.func @_rk4_gru_kernel(%arg0: i32, %arg1: memref<5x256xf32, #tpu.memory_space<vmem>>, %arg2: memref<64x3xf32, #tpu.memory_space<vmem>>, %arg3: memref<64x1xf32, #tpu.memory_space<vmem>>, %arg4: memref<16x64xf32, #tpu.memory_space<vmem>>, %arg5: memref<16x1xf32, #tpu.memory_space<vmem>>, %arg6: memref<32x4xf32, #tpu.memory_space<vmem>>, %arg7: memref<32x1xf32, #tpu.memory_space<vmem>>, %arg8: memref<32x32xf32, #tpu.memory_space<vmem>>, %arg9: memref<32x1xf32, #tpu.memory_space<vmem>>, %arg10: memref<32x1xf32, #tpu.memory_space<vmem>>, %arg11: memref<1x1xf32, #tpu.memory_space<vmem>>, %arg12: memref<9x256xf32, #tpu.memory_space<vmem>>) attributes {dimension_semantics = [#tpu.dimension_semantics<parallel>], iteration_bounds = array<i64: 1>, scalar_prefetch = 0 : i64, scratch_operands = 0 : i64, tpu.core_type = #tpu.core_type<tc>, window_params = [{transform_indices = @transform_0, window_bounds = array<i64: 5, 256>}, {pipeline_mode = #tpu.pipeline_mode<synchronous>, transform_indices = @transform_1, window_bounds = array<i64: 64, 3>}, {pipeline_mode = #tpu.pipeline_mode<synchronous>, transform_indices = @transform_2, window_bounds = array<i64: 64, 1>}, {pipeline_mode = #tpu.pipeline_mode<synchronous>, transform_indices = @transform_3, window_bounds = array<i64: 16, 64>}, {pipeline_mode = #tpu.pipeline_mode<synchronous>, transform_indices = @transform_4, window_bounds = array<i64: 16, 1>}, {pipeline_mode = #tpu.pipeline_mode<synchronous>, transform_indices = @transform_5, window_bounds = array<i64: 32, 4>}, {pipeline_mode = #tpu.pipeline_mode<synchronous>, transform_indices = @transform_6, window_bounds = array<i64: 32, 1>}, {pipeline_mode = #tpu.pipeline_mode<synchronous>, transform_indices = @transform_7, window_bounds = array<i64: 32, 32>}, {pipeline_mode = #tpu.pipeline_mode<synchronous>, transform_indices = @transform_8, window_bounds = array<i64: 32, 1>}, {pipeline_mode = #tpu.pipeline_mode<synchronous>, transform_indices = @transform_9, window_bounds = array<i64: 32, 1>}, {pipeline_mode = #tpu.pipeline_mode<synchronous>, transform_indices = @transform_10, window_bounds = array<i64: 1, 1>}, {transform_indices = @transform_11, window_bounds = array<i64: 9, 256>}]} {
    %c0 = arith.constant 0 : index
    %c0_0 = arith.constant 0 : index
    %0 = vector.load %arg1[%c0, %c0_0] : memref<5x256xf32, #tpu.memory_space<vmem>>, vector<5x256xf32>
    %1 = vector.extract_strided_slice %0 {offsets = [0, 0], sizes = [3, 256], strides = [1, 1]} : vector<5x256xf32> to vector<3x256xf32>
    %2 = vector.extract_strided_slice %0 {offsets = [0, 0], sizes = [1, 256], strides = [1, 1]} : vector<5x256xf32> to vector<1x256xf32>
    %3 = vector.extract_strided_slice %0 {offsets = [1, 0], sizes = [1, 256], strides = [1, 1]} : vector<5x256xf32> to vector<1x256xf32>
    %4 = vector.extract_strided_slice %0 {offsets = [2, 0], sizes = [1, 256], strides = [1, 1]} : vector<5x256xf32> to vector<1x256xf32>
    %5 = vector.extract_strided_slice %0 {offsets = [3, 0], sizes = [1, 256], strides = [1, 1]} : vector<5x256xf32> to vector<1x256xf32>
    %6 = vector.extract_strided_slice %0 {offsets = [4, 0], sizes = [1, 256], strides = [1, 1]} : vector<5x256xf32> to vector<1x256xf32>
    %7 = arith.addf %5, %6 : vector<1x256xf32>
    %cst = arith.constant 5.000000e-01 : f32
    %8 = vector.broadcast %cst : f32 to vector<1x256xf32>
    %9 = arith.mulf %8, %7 : vector<1x256xf32>
    %c0_1 = arith.constant 0 : index
    %c0_2 = arith.constant 0 : index
    %10 = vector.load %arg2[%c0_1, %c0_2] : memref<64x3xf32, #tpu.memory_space<vmem>>, vector<64x3xf32>
    %cst_3 = arith.constant dense<0.000000e+00> : vector<64x256xf32>
    %11 = tpu.matmul %10, %1, %cst_3 {dimension_numbers = #tpu.dot_dimension_numbers<[1], [0], [0], [1], [0, 0, 1, 1], [], []>} : vector<64x3xf32>, vector<3x256xf32>, vector<64x256xf32> -> vector<64x256xf32>
    %c0_4 = arith.constant 0 : index
    %c0_5 = arith.constant 0 : index
    %12 = vector.load %arg3[%c0_4, %c0_5] : memref<64x1xf32, #tpu.memory_space<vmem>>, vector<64x1xf32>
    %13 = vector.broadcast %12 : vector<64x1xf32> to vector<64x256xf32>
    %14 = arith.addf %11, %13 : vector<64x256xf32>
    %cst_6 = arith.constant 0.000000e+00 : f32
    %15 = vector.broadcast %cst_6 : f32 to vector<64x256xf32>
    %16 = arith.maximumf %14, %15 : vector<64x256xf32>
    %c0_7 = arith.constant 0 : index
    %c0_8 = arith.constant 0 : index
    %17 = vector.load %arg4[%c0_7, %c0_8] : memref<16x64xf32, #tpu.memory_space<vmem>>, vector<16x64xf32>
    %cst_9 = arith.constant dense<0.000000e+00> : vector<16x256xf32>
    %18 = tpu.matmul %17, %16, %cst_9 {dimension_numbers = #tpu.dot_dimension_numbers<[1], [0], [0], [1], [0, 0, 1, 1], [], []>} : vector<16x64xf32>, vector<64x256xf32>, vector<16x256xf32> -> vector<16x256xf32>
    %c0_10 = arith.constant 0 : index
    %c0_11 = arith.constant 0 : index
    %19 = vector.load %arg5[%c0_10, %c0_11] : memref<16x1xf32, #tpu.memory_space<vmem>>, vector<16x1xf32>
    %20 = vector.broadcast %19 : vector<16x1xf32> to vector<16x256xf32>
    %21 = arith.addf %18, %20 : vector<16x256xf32>
    %22 = arith.negf %21 : vector<16x256xf32>
    %23 = math.exp %22 : vector<16x256xf32>
    %cst_12 = arith.constant 1.000000e+00 : f32
    %24 = vector.broadcast %cst_12 : f32 to vector<16x256xf32>
    %25 = arith.addf %24, %23 : vector<16x256xf32>
    %26 = arith.divf %24, %25 : vector<16x256xf32>
    %27 = vector.extract_strided_slice %26 {offsets = [0, 0], sizes = [3, 256], strides = [1, 1]} : vector<16x256xf32> to vector<3x256xf32>
    %28 = vector.extract_strided_slice %26 {offsets = [8, 0], sizes = [3, 256], strides = [1, 1]} : vector<16x256xf32> to vector<3x256xf32>
    %29 = vector.extract_strided_slice %26 {offsets = [8, 0], sizes = [1, 256], strides = [1, 1]} : vector<16x256xf32> to vector<1x256xf32>
    %30 = vector.extract_strided_slice %26 {offsets = [9, 0], sizes = [1, 256], strides = [1, 1]} : vector<16x256xf32> to vector<1x256xf32>
    %31 = vector.extract_strided_slice %26 {offsets = [10, 0], sizes = [1, 256], strides = [1, 1]} : vector<16x256xf32> to vector<1x256xf32>
    %32 = vector.extract_strided_slice %26 {offsets = [0, 0], sizes = [1, 256], strides = [1, 1]} : vector<16x256xf32> to vector<1x256xf32>
    %33 = arith.mulf %32, %2 : vector<1x256xf32>
    %34 = vector.extract_strided_slice %26 {offsets = [1, 0], sizes = [1, 256], strides = [1, 1]} : vector<16x256xf32> to vector<1x256xf32>
    %35 = arith.mulf %34, %3 : vector<1x256xf32>
    %36 = vector.extract_strided_slice %26 {offsets = [2, 0], sizes = [1, 256], strides = [1, 1]} : vector<16x256xf32> to vector<1x256xf32>
    %37 = arith.mulf %36, %4 : vector<1x256xf32>
    %c0_13 = arith.constant 0 : index
    %c0_14 = arith.constant 0 : index
    %38 = vector.load %arg6[%c0_13, %c0_14] : memref<32x4xf32, #tpu.memory_space<vmem>>, vector<32x4xf32>
    %39 = vector.extract_strided_slice %38 {offsets = [0, 0], sizes = [32, 1], strides = [1, 1]} : vector<32x4xf32> to vector<32x1xf32>
    %40 = vector.shape_cast %39 : vector<32x1xf32> to vector<32x1xf32>
    %41 = vector.broadcast %40 : vector<32x1xf32> to vector<32x256xf32>
    %42 = vector.extract_strided_slice %38 {offsets = [0, 1], sizes = [32, 1], strides = [1, 1]} : vector<32x4xf32> to vector<32x1xf32>
    %43 = vector.shape_cast %42 : vector<32x1xf32> to vector<32x1xf32>
    %44 = vector.broadcast %43 : vector<32x1xf32> to vector<32x256xf32>
    %45 = vector.extract_strided_slice %38 {offsets = [0, 2], sizes = [32, 1], strides = [1, 1]} : vector<32x4xf32> to vector<32x1xf32>
    %46 = vector.shape_cast %45 : vector<32x1xf32> to vector<32x1xf32>
    %47 = vector.broadcast %46 : vector<32x1xf32> to vector<32x256xf32>
    %48 = vector.extract_strided_slice %38 {offsets = [0, 3], sizes = [32, 1], strides = [1, 1]} : vector<32x4xf32> to vector<32x1xf32>
    %49 = vector.shape_cast %48 : vector<32x1xf32> to vector<32x1xf32>
    %50 = vector.broadcast %49 : vector<32x1xf32> to vector<32x256xf32>
    %c0_15 = arith.constant 0 : index
    %c0_16 = arith.constant 0 : index
    %51 = vector.load %arg7[%c0_15, %c0_16] : memref<32x1xf32, #tpu.memory_space<vmem>>, vector<32x1xf32>
    %52 = vector.shape_cast %51 : vector<32x1xf32> to vector<32x1xf32>
    %53 = vector.broadcast %52 : vector<32x1xf32> to vector<32x256xf32>
    %c0_17 = arith.constant 0 : index
    %c0_18 = arith.constant 0 : index
    %54 = vector.load %arg9[%c0_17, %c0_18] : memref<32x1xf32, #tpu.memory_space<vmem>>, vector<32x1xf32>
    %55 = vector.shape_cast %54 : vector<32x1xf32> to vector<32x1xf32>
    %56 = vector.broadcast %55 : vector<32x1xf32> to vector<32x256xf32>
    %c0_19 = arith.constant 0 : index
    %c0_20 = arith.constant 0 : index
    %57 = vector.load %arg10[%c0_19, %c0_20] : memref<32x1xf32, #tpu.memory_space<vmem>>, vector<32x1xf32>
    %58 = vector.shape_cast %57 : vector<32x1xf32> to vector<32x1xf32>
    %59 = vector.broadcast %58 : vector<32x1xf32> to vector<32x256xf32>
    %c0_21 = arith.constant 0 : index
    %c0_22 = arith.constant 0 : index
    %60 = vector.load %arg11[%c0_21, %c0_22] : memref<1x1xf32, #tpu.memory_space<vmem>>, vector<1x1xf32>
    %61 = vector.shape_cast %60 : vector<1x1xf32> to vector<1x1xf32>
    %62 = vector.broadcast %61 : vector<1x1xf32> to vector<1x256xf32>
    %c0_23 = arith.constant 0 : index
    %c0_24 = arith.constant 0 : index
    %63 = vector.load %arg8[%c0_23, %c0_24] : memref<32x32xf32, #tpu.memory_space<vmem>>, vector<32x32xf32>
    %cst_25 = arith.constant 0.000000e+00 : f32
    %64 = vector.broadcast %cst_25 : f32 to vector<1x256xf32>
    %65 = arith.subf %64, %37 : vector<1x256xf32>
    %66 = arith.subf %65, %5 : vector<1x256xf32>
    %67 = vector.broadcast %33 : vector<1x256xf32> to vector<32x256xf32>
    %68 = arith.mulf %41, %67 : vector<32x256xf32>
    %69 = vector.broadcast %35 : vector<1x256xf32> to vector<32x256xf32>
    %70 = arith.mulf %44, %69 : vector<32x256xf32>
    %71 = arith.addf %68, %70 : vector<32x256xf32>
    %72 = vector.broadcast %37 : vector<1x256xf32> to vector<32x256xf32>
    %73 = arith.mulf %47, %72 : vector<32x256xf32>
    %74 = arith.addf %71, %73 : vector<32x256xf32>
    %75 = vector.broadcast %66 : vector<1x256xf32> to vector<32x256xf32>
    %76 = arith.mulf %50, %75 : vector<32x256xf32>
    %77 = arith.addf %74, %76 : vector<32x256xf32>
    %78 = arith.addf %77, %53 : vector<32x256xf32>
    %cst_26 = arith.constant 0.000000e+00 : f32
    %79 = vector.broadcast %cst_26 : f32 to vector<32x256xf32>
    %80 = arith.maximumf %78, %79 : vector<32x256xf32>
    %cst_27 = arith.constant dense<0.000000e+00> : vector<32x256xf32>
    %81 = tpu.matmul %63, %80, %cst_27 {dimension_numbers = #tpu.dot_dimension_numbers<[1], [0], [0], [1], [0, 0, 1, 1], [], []>} : vector<32x32xf32>, vector<32x256xf32>, vector<32x256xf32> -> vector<32x256xf32>
    %82 = arith.addf %81, %56 : vector<32x256xf32>
    %cst_28 = arith.constant 0.000000e+00 : f32
    %83 = vector.broadcast %cst_28 : f32 to vector<32x256xf32>
    %84 = arith.maximumf %82, %83 : vector<32x256xf32>
    %85 = arith.mulf %59, %84 : vector<32x256xf32>
    %cst_29 = arith.constant dense<0.000000e+00> : vector<256xf32>
    %86 = vector.multi_reduction <add>, %85, %cst_29 [0] : vector<32x256xf32> to vector<256xf32>
    %87 = vector.shape_cast %86 : vector<256xf32> to vector<1x256xf32>
    %88 = arith.addf %87, %62 : vector<1x256xf32>
    %cst_30 = arith.constant 5.000000e-03 : f32
    %89 = vector.broadcast %cst_30 : f32 to vector<1x256xf32>
    %90 = arith.mulf %89, %35 : vector<1x256xf32>
    %91 = arith.addf %33, %90 : vector<1x256xf32>
    %cst_31 = arith.constant 5.000000e-03 : f32
    %92 = vector.broadcast %cst_31 : f32 to vector<1x256xf32>
    %93 = arith.mulf %92, %66 : vector<1x256xf32>
    %94 = arith.addf %35, %93 : vector<1x256xf32>
    %cst_32 = arith.constant 5.000000e-03 : f32
    %95 = vector.broadcast %cst_32 : f32 to vector<1x256xf32>
    %96 = arith.mulf %95, %88 : vector<1x256xf32>
    %97 = arith.addf %37, %96 : vector<1x256xf32>
    %cst_33 = arith.constant 0.000000e+00 : f32
    %98 = vector.broadcast %cst_33 : f32 to vector<1x256xf32>
    %99 = arith.subf %98, %97 : vector<1x256xf32>
    %100 = arith.subf %99, %9 : vector<1x256xf32>
    %101 = vector.broadcast %91 : vector<1x256xf32> to vector<32x256xf32>
    %102 = arith.mulf %41, %101 : vector<32x256xf32>
    %103 = vector.broadcast %94 : vector<1x256xf32> to vector<32x256xf32>
    %104 = arith.mulf %44, %103 : vector<32x256xf32>
    %105 = arith.addf %102, %104 : vector<32x256xf32>
    %106 = vector.broadcast %97 : vector<1x256xf32> to vector<32x256xf32>
    %107 = arith.mulf %47, %106 : vector<32x256xf32>
    %108 = arith.addf %105, %107 : vector<32x256xf32>
    %109 = vector.broadcast %100 : vector<1x256xf32> to vector<32x256xf32>
    %110 = arith.mulf %50, %109 : vector<32x256xf32>
    %111 = arith.addf %108, %110 : vector<32x256xf32>
    %112 = arith.addf %111, %53 : vector<32x256xf32>
    %cst_34 = arith.constant 0.000000e+00 : f32
    %113 = vector.broadcast %cst_34 : f32 to vector<32x256xf32>
    %114 = arith.maximumf %112, %113 : vector<32x256xf32>
    %cst_35 = arith.constant dense<0.000000e+00> : vector<32x256xf32>
    %115 = tpu.matmul %63, %114, %cst_35 {dimension_numbers = #tpu.dot_dimension_numbers<[1], [0], [0], [1], [0, 0, 1, 1], [], []>} : vector<32x32xf32>, vector<32x256xf32>, vector<32x256xf32> -> vector<32x256xf32>
    %116 = arith.addf %115, %56 : vector<32x256xf32>
    %cst_36 = arith.constant 0.000000e+00 : f32
    %117 = vector.broadcast %cst_36 : f32 to vector<32x256xf32>
    %118 = arith.maximumf %116, %117 : vector<32x256xf32>
    %119 = arith.mulf %59, %118 : vector<32x256xf32>
    %cst_37 = arith.constant dense<0.000000e+00> : vector<256xf32>
    %120 = vector.multi_reduction <add>, %119, %cst_37 [0] : vector<32x256xf32> to vector<256xf32>
    %121 = vector.shape_cast %120 : vector<256xf32> to vector<1x256xf32>
    %122 = arith.addf %121, %62 : vector<1x256xf32>
    %cst_38 = arith.constant 5.000000e-03 : f32
    %123 = vector.broadcast %cst_38 : f32 to vector<1x256xf32>
    %124 = arith.mulf %123, %94 : vector<1x256xf32>
    %125 = arith.addf %33, %124 : vector<1x256xf32>
    %cst_39 = arith.constant 5.000000e-03 : f32
    %126 = vector.broadcast %cst_39 : f32 to vector<1x256xf32>
    %127 = arith.mulf %126, %100 : vector<1x256xf32>
    %128 = arith.addf %35, %127 : vector<1x256xf32>
    %cst_40 = arith.constant 5.000000e-03 : f32
    %129 = vector.broadcast %cst_40 : f32 to vector<1x256xf32>
    %130 = arith.mulf %129, %122 : vector<1x256xf32>
    %131 = arith.addf %37, %130 : vector<1x256xf32>
    %cst_41 = arith.constant 0.000000e+00 : f32
    %132 = vector.broadcast %cst_41 : f32 to vector<1x256xf32>
    %133 = arith.subf %132, %131 : vector<1x256xf32>
    %134 = arith.subf %133, %9 : vector<1x256xf32>
    %135 = vector.broadcast %125 : vector<1x256xf32> to vector<32x256xf32>
    %136 = arith.mulf %41, %135 : vector<32x256xf32>
    %137 = vector.broadcast %128 : vector<1x256xf32> to vector<32x256xf32>
    %138 = arith.mulf %44, %137 : vector<32x256xf32>
    %139 = arith.addf %136, %138 : vector<32x256xf32>
    %140 = vector.broadcast %131 : vector<1x256xf32> to vector<32x256xf32>
    %141 = arith.mulf %47, %140 : vector<32x256xf32>
    %142 = arith.addf %139, %141 : vector<32x256xf32>
    %143 = vector.broadcast %134 : vector<1x256xf32> to vector<32x256xf32>
    %144 = arith.mulf %50, %143 : vector<32x256xf32>
    %145 = arith.addf %142, %144 : vector<32x256xf32>
    %146 = arith.addf %145, %53 : vector<32x256xf32>
    %cst_42 = arith.constant 0.000000e+00 : f32
    %147 = vector.broadcast %cst_42 : f32 to vector<32x256xf32>
    %148 = arith.maximumf %146, %147 : vector<32x256xf32>
    %cst_43 = arith.constant dense<0.000000e+00> : vector<32x256xf32>
    %149 = tpu.matmul %63, %148, %cst_43 {dimension_numbers = #tpu.dot_dimension_numbers<[1], [0], [0], [1], [0, 0, 1, 1], [], []>} : vector<32x32xf32>, vector<32x256xf32>, vector<32x256xf32> -> vector<32x256xf32>
    %150 = arith.addf %149, %56 : vector<32x256xf32>
    %cst_44 = arith.constant 0.000000e+00 : f32
    %151 = vector.broadcast %cst_44 : f32 to vector<32x256xf32>
    %152 = arith.maximumf %150, %151 : vector<32x256xf32>
    %153 = arith.mulf %59, %152 : vector<32x256xf32>
    %cst_45 = arith.constant dense<0.000000e+00> : vector<256xf32>
    %154 = vector.multi_reduction <add>, %153, %cst_45 [0] : vector<32x256xf32> to vector<256xf32>
    %155 = vector.shape_cast %154 : vector<256xf32> to vector<1x256xf32>
    %156 = arith.addf %155, %62 : vector<1x256xf32>
    %cst_46 = arith.constant 0.00999999977 : f32
    %157 = vector.broadcast %cst_46 : f32 to vector<1x256xf32>
    %158 = arith.mulf %157, %128 : vector<1x256xf32>
    %159 = arith.addf %33, %158 : vector<1x256xf32>
    %cst_47 = arith.constant 0.00999999977 : f32
    %160 = vector.broadcast %cst_47 : f32 to vector<1x256xf32>
    %161 = arith.mulf %160, %134 : vector<1x256xf32>
    %162 = arith.addf %35, %161 : vector<1x256xf32>
    %cst_48 = arith.constant 0.00999999977 : f32
    %163 = vector.broadcast %cst_48 : f32 to vector<1x256xf32>
    %164 = arith.mulf %163, %156 : vector<1x256xf32>
    %165 = arith.addf %37, %164 : vector<1x256xf32>
    %cst_49 = arith.constant 0.000000e+00 : f32
    %166 = vector.broadcast %cst_49 : f32 to vector<1x256xf32>
    %167 = arith.subf %166, %165 : vector<1x256xf32>
    %168 = arith.subf %167, %6 : vector<1x256xf32>
    %169 = vector.broadcast %159 : vector<1x256xf32> to vector<32x256xf32>
    %170 = arith.mulf %41, %169 : vector<32x256xf32>
    %171 = vector.broadcast %162 : vector<1x256xf32> to vector<32x256xf32>
    %172 = arith.mulf %44, %171 : vector<32x256xf32>
    %173 = arith.addf %170, %172 : vector<32x256xf32>
    %174 = vector.broadcast %165 : vector<1x256xf32> to vector<32x256xf32>
    %175 = arith.mulf %47, %174 : vector<32x256xf32>
    %176 = arith.addf %173, %175 : vector<32x256xf32>
    %177 = vector.broadcast %168 : vector<1x256xf32> to vector<32x256xf32>
    %178 = arith.mulf %50, %177 : vector<32x256xf32>
    %179 = arith.addf %176, %178 : vector<32x256xf32>
    %180 = arith.addf %179, %53 : vector<32x256xf32>
    %cst_50 = arith.constant 0.000000e+00 : f32
    %181 = vector.broadcast %cst_50 : f32 to vector<32x256xf32>
    %182 = arith.maximumf %180, %181 : vector<32x256xf32>
    %cst_51 = arith.constant dense<0.000000e+00> : vector<32x256xf32>
    %183 = tpu.matmul %63, %182, %cst_51 {dimension_numbers = #tpu.dot_dimension_numbers<[1], [0], [0], [1], [0, 0, 1, 1], [], []>} : vector<32x32xf32>, vector<32x256xf32>, vector<32x256xf32> -> vector<32x256xf32>
    %184 = arith.addf %183, %56 : vector<32x256xf32>
    %cst_52 = arith.constant 0.000000e+00 : f32
    %185 = vector.broadcast %cst_52 : f32 to vector<32x256xf32>
    %186 = arith.maximumf %184, %185 : vector<32x256xf32>
    %187 = arith.mulf %59, %186 : vector<32x256xf32>
    %cst_53 = arith.constant dense<0.000000e+00> : vector<256xf32>
    %188 = vector.multi_reduction <add>, %187, %cst_53 [0] : vector<32x256xf32> to vector<256xf32>
    %189 = vector.shape_cast %188 : vector<256xf32> to vector<1x256xf32>
    %190 = arith.addf %189, %62 : vector<1x256xf32>
    %cst_54 = arith.constant 2.000000e+00 : f32
    %191 = vector.broadcast %cst_54 : f32 to vector<1x256xf32>
    %192 = arith.mulf %191, %94 : vector<1x256xf32>
    %193 = arith.addf %35, %192 : vector<1x256xf32>
    %cst_55 = arith.constant 2.000000e+00 : f32
    %194 = vector.broadcast %cst_55 : f32 to vector<1x256xf32>
    %195 = arith.mulf %194, %128 : vector<1x256xf32>
    %196 = arith.addf %193, %195 : vector<1x256xf32>
    %197 = arith.addf %196, %162 : vector<1x256xf32>
    %cst_56 = arith.constant 0.00166666671 : f32
    %198 = vector.broadcast %cst_56 : f32 to vector<1x256xf32>
    %199 = arith.mulf %198, %197 : vector<1x256xf32>
    %200 = arith.addf %33, %199 : vector<1x256xf32>
    %cst_57 = arith.constant 2.000000e+00 : f32
    %201 = vector.broadcast %cst_57 : f32 to vector<1x256xf32>
    %202 = arith.mulf %201, %100 : vector<1x256xf32>
    %203 = arith.addf %66, %202 : vector<1x256xf32>
    %cst_58 = arith.constant 2.000000e+00 : f32
    %204 = vector.broadcast %cst_58 : f32 to vector<1x256xf32>
    %205 = arith.mulf %204, %134 : vector<1x256xf32>
    %206 = arith.addf %203, %205 : vector<1x256xf32>
    %207 = arith.addf %206, %168 : vector<1x256xf32>
    %cst_59 = arith.constant 0.00166666671 : f32
    %208 = vector.broadcast %cst_59 : f32 to vector<1x256xf32>
    %209 = arith.mulf %208, %207 : vector<1x256xf32>
    %210 = arith.addf %35, %209 : vector<1x256xf32>
    %cst_60 = arith.constant 2.000000e+00 : f32
    %211 = vector.broadcast %cst_60 : f32 to vector<1x256xf32>
    %212 = arith.mulf %211, %122 : vector<1x256xf32>
    %213 = arith.addf %88, %212 : vector<1x256xf32>
    %cst_61 = arith.constant 2.000000e+00 : f32
    %214 = vector.broadcast %cst_61 : f32 to vector<1x256xf32>
    %215 = arith.mulf %214, %156 : vector<1x256xf32>
    %216 = arith.addf %213, %215 : vector<1x256xf32>
    %217 = arith.addf %216, %190 : vector<1x256xf32>
    %cst_62 = arith.constant 0.00166666671 : f32
    %218 = vector.broadcast %cst_62 : f32 to vector<1x256xf32>
    %219 = arith.mulf %218, %217 : vector<1x256xf32>
    %220 = arith.addf %37, %219 : vector<1x256xf32>
    %221 = arith.mulf %29, %200 : vector<1x256xf32>
    %cst_63 = arith.constant 1.000000e+00 : f32
    %222 = vector.broadcast %cst_63 : f32 to vector<1x256xf32>
    %223 = arith.subf %222, %29 : vector<1x256xf32>
    %224 = arith.mulf %223, %2 : vector<1x256xf32>
    %225 = arith.addf %221, %224 : vector<1x256xf32>
    %226 = arith.mulf %30, %210 : vector<1x256xf32>
    %cst_64 = arith.constant 1.000000e+00 : f32
    %227 = vector.broadcast %cst_64 : f32 to vector<1x256xf32>
    %228 = arith.subf %227, %30 : vector<1x256xf32>
    %229 = arith.mulf %228, %3 : vector<1x256xf32>
    %230 = arith.addf %226, %229 : vector<1x256xf32>
    %231 = arith.mulf %31, %220 : vector<1x256xf32>
    %cst_65 = arith.constant 1.000000e+00 : f32
    %232 = vector.broadcast %cst_65 : f32 to vector<1x256xf32>
    %233 = arith.subf %232, %31 : vector<1x256xf32>
    %234 = arith.mulf %233, %4 : vector<1x256xf32>
    %235 = arith.addf %231, %234 : vector<1x256xf32>
    %236 = tpu.concatenate %225, %230, %235, %27, %28 in 0 : vector<1x256xf32>, vector<1x256xf32>, vector<1x256xf32>, vector<3x256xf32>, vector<3x256xf32> -> vector<9x256xf32>
    %c0_66 = arith.constant 0 : index
    %c0_67 = arith.constant 0 : index
    %237 = vector.load %arg12[%c0_66, %c0_67] : memref<9x256xf32, #tpu.memory_space<vmem>>, vector<9x256xf32>
    tpu.vector_store %arg12[%c0_66, %c0_67], %236 {strides = array<i32>} : memref<9x256xf32, #tpu.memory_space<vmem>>, vector<9x256xf32>,
    return
  }
  func.func @transform_0(%arg0: i32) -> (i32, i32) {
    %c0_i32 = arith.constant 0 : i32
    %c0_i32_0 = arith.constant 0 : i32
    return %c0_i32, %arg0 : i32, i32
  }
  func.func @transform_1(%arg0: i32) -> (i32, i32) {
    %c0_i32 = arith.constant 0 : i32
    %c0_i32_0 = arith.constant 0 : i32
    %c0_i32_1 = arith.constant 0 : i32
    return %c0_i32, %c0_i32_0 : i32, i32
  }
  func.func @transform_2(%arg0: i32) -> (i32, i32) {
    %c0_i32 = arith.constant 0 : i32
    %c0_i32_0 = arith.constant 0 : i32
    %c0_i32_1 = arith.constant 0 : i32
    return %c0_i32, %c0_i32_0 : i32, i32
  }
  func.func @transform_3(%arg0: i32) -> (i32, i32) {
    %c0_i32 = arith.constant 0 : i32
    %c0_i32_0 = arith.constant 0 : i32
    %c0_i32_1 = arith.constant 0 : i32
    return %c0_i32, %c0_i32_0 : i32, i32
  }
  func.func @transform_4(%arg0: i32) -> (i32, i32) {
    %c0_i32 = arith.constant 0 : i32
    %c0_i32_0 = arith.constant 0 : i32
    %c0_i32_1 = arith.constant 0 : i32
    return %c0_i32, %c0_i32_0 : i32, i32
  }
  func.func @transform_5(%arg0: i32) -> (i32, i32) {
    %c0_i32 = arith.constant 0 : i32
    %c0_i32_0 = arith.constant 0 : i32
    %c0_i32_1 = arith.constant 0 : i32
    return %c0_i32, %c0_i32_0 : i32, i32
  }
  func.func @transform_6(%arg0: i32) -> (i32, i32) {
    %c0_i32 = arith.constant 0 : i32
    %c0_i32_0 = arith.constant 0 : i32
    %c0_i32_1 = arith.constant 0 : i32
    return %c0_i32, %c0_i32_0 : i32, i32
  }
  func.func @transform_7(%arg0: i32) -> (i32, i32) {
    %c0_i32 = arith.constant 0 : i32
    %c0_i32_0 = arith.constant 0 : i32
    %c0_i32_1 = arith.constant 0 : i32
    return %c0_i32, %c0_i32_0 : i32, i32
  }
  func.func @transform_8(%arg0: i32) -> (i32, i32) {
    %c0_i32 = arith.constant 0 : i32
    %c0_i32_0 = arith.constant 0 : i32
    %c0_i32_1 = arith.constant 0 : i32
    return %c0_i32, %c0_i32_0 : i32, i32
  }
  func.func @transform_9(%arg0: i32) -> (i32, i32) {
    %c0_i32 = arith.constant 0 : i32
    %c0_i32_0 = arith.constant 0 : i32
    %c0_i32_1 = arith.constant 0 : i32
    return %c0_i32, %c0_i32_0 : i32, i32
  }
  func.func @transform_10(%arg0: i32) -> (i32, i32) {
    %c0_i32 = arith.constant 0 : i32
    %c0_i32_0 = arith.constant 0 : i32
    %c0_i32_1 = arith.constant 0 : i32
    return %c0_i32, %c0_i32_0 : i32, i32
  }
  func.func @transform_11(%arg0: i32) -> (i32, i32) {
    %c0_i32 = arith.constant 0 : i32
    %c0_i32_0 = arith.constant 0 : i32
    return %c0_i32, %arg0 : i32, i32
  }
}

</mosaic_0001>

<llo_original>
// kernel: tpu_custom_call.1
$region0: #{tpu_custom_call.1}
  #allocation0 [shape = 'u32[]', space=smem, size = 0x4, offset = 0x4, fixed_abs, tag = 'smem constant byte address 0x4 - core index']
  #allocation1 [shape = 'u32[144,128]{1,0:T(1,128)}', space=vmem, size = 0x12000, scoped, tag = 'internal scratch']
  #allocation2 [shape = 'f32[1,1]{1,0:T(1,128)S(1)}', space=vmem, size = 0x200, scoped, tag = 'scoped memory for tpu_custom_call.1']
  %s0 = inlined_call_operand.vmem [shape: f32[5,256], index: 0, kind: input, shape index: {}]
  %s1 = inlined_call_operand.vmem [shape: f32[64,3], index: 1, kind: input, shape index: {}]
  %s2 = inlined_call_operand.vmem [shape: f32[64,1], index: 2, kind: input, shape index: {}]
  %s3 = inlined_call_operand.vmem [shape: f32[16,64], index: 3, kind: input, shape index: {}]
  %s4 = inlined_call_operand.vmem [shape: f32[16,1], index: 4, kind: input, shape index: {}]
  %s5 = inlined_call_operand.vmem [shape: f32[32,4], index: 5, kind: input, shape index: {}]
  %s6 = inlined_call_operand.vmem [shape: f32[32,1], index: 6, kind: input, shape index: {}]
  %s7 = inlined_call_operand.vmem [shape: f32[32,32], index: 7, kind: input, shape index: {}]
  %s8 = inlined_call_operand.vmem [shape: f32[32,1], index: 8, kind: input, shape index: {}]
  %s9 = inlined_call_operand.vmem [shape: f32[32,1], index: 9, kind: input, shape index: {}]
  %s10 = inlined_call_operand.<no memory space> [shape: f32[1,1], index: 10, kind: input, shape index: {}]
  %s11 = inlined_call_operand.hbm [shape: f32[9,256], index: 11, kind: output, shape index: {}]
  %s12 = sld [smem:[#allocation0]]
  $region54: #{tpu_custom_call.1} parent=0
    _
  %s14 = ssub.s32 1, %s12
  %s15 = scalar_select 0, %s14, %s12
  %v16 = vstv %s10
  %17 = vst [vmem:[#allocation2] sm:$0x1] %v16
  $region1: #{tpu_custom_call.1} parent=0
    #allocation3 [shape = 'u8[16384]{0}', space=vmem, size = 0x4000, scoped, tag = 'output window, operand 0, single buffered']
    #allocation4 [shape = 's32[1]{0}', space=sflag, size = 0x4, scoped, tag = 'scoped memory for tpu_custom_call.1']
    %18 = vsyncpa [#allocation4], 0
    // Predicated region
    $region2: #{tpu_custom_call.1} parent=1 // pred_check
      _
    $region3: #{tpu_custom_call.1} parent=1 // pred_check_branch
      %20 = sbr.rel (0) target = $region5
    $region4: #{tpu_custom_call.1} parent=1 // pred_region
      _
    $region5: #{tpu_custom_call.1} parent=1 // pred_fallthru
      _
    // Predicated region
    $region6: #{tpu_custom_call.1} parent=1 // pred_check
      _
    $region7: #{tpu_custom_call.1} parent=1 // pred_check_branch
      %22 = sbr.rel (0) target = $region9
    $region8: #{tpu_custom_call.1} parent=1 // pred_region
      _
    $region9: #{tpu_custom_call.1} parent=1 // pred_fallthru
      _
    // Predicated region
    $region10: #{tpu_custom_call.1} parent=1 // pred_check
      _
    $region11: #{tpu_custom_call.1} parent=1 // pred_check_branch
      %24 = sbr.rel (0) target = $region13
    $region12: #{tpu_custom_call.1} parent=1 // pred_region
      _
    $region13: #{tpu_custom_call.1} parent=1 // pred_fallthru
      _
    // Predicated region
    $region14: #{tpu_custom_call.1} parent=1 // pred_check
      _
    $region15: #{tpu_custom_call.1} parent=1 // pred_check_branch
      %26 = sbr.rel (0) target = $region17
    $region16: #{tpu_custom_call.1} parent=1 // pred_region
      _
    $region17: #{tpu_custom_call.1} parent=1 // pred_fallthru
      _
    // Predicated region
    $region18: #{tpu_custom_call.1} parent=1 // pred_check
      _
    $region19: #{tpu_custom_call.1} parent=1 // pred_check_branch
      %28 = sbr.rel (0) target = $region21
    $region20: #{tpu_custom_call.1} parent=1 // pred_region
      _
    $region21: #{tpu_custom_call.1} parent=1 // pred_fallthru
      _
    // Predicated region
    $region22: #{tpu_custom_call.1} parent=1 // pred_check
      _
    $region23: #{tpu_custom_call.1} parent=1 // pred_check_branch
      %30 = sbr.rel (0) target = $region25
    $region24: #{tpu_custom_call.1} parent=1 // pred_region
      _
    $region25: #{tpu_custom_call.1} parent=1 // pred_fallthru
      _
    // Predicated region
    $region26: #{tpu_custom_call.1} parent=1 // pred_check
      _
    $region27: #{tpu_custom_call.1} parent=1 // pred_check_branch
      %32 = sbr.rel (0) target = $region29
    $region28: #{tpu_custom_call.1} parent=1 // pred_region
      _
    $region29: #{tpu_custom_call.1} parent=1 // pred_fallthru
      _
    // Predicated region
    $region30: #{tpu_custom_call.1} parent=1 // pred_check
      _
    $region31: #{tpu_custom_call.1} parent=1 // pred_check_branch
      %34 = sbr.rel (0) target = $region33
    $region32: #{tpu_custom_call.1} parent=1 // pred_region
      _
    $region33: #{tpu_custom_call.1} parent=1 // pred_fallthru
      _
    // Predicated region
    $region34: #{tpu_custom_call.1} parent=1 // pred_check
      _
    $region35: #{tpu_custom_call.1} parent=1 // pred_check_branch
      %36 = sbr.rel (0) target = $region37
    $region36: #{tpu_custom_call.1} parent=1 // pred_region
      _
    $region37: #{tpu_custom_call.1} parent=1 // pred_fallthru
      _
    // Predicated region
    $region38: #{tpu_custom_call.1} parent=1 // pred_check
      _
    $region39: #{tpu_custom_call.1} parent=1 // pred_check_branch
      %38 = sbr.rel (0) target = $region41
    $region40: #{tpu_custom_call.1} parent=1 // pred_region
      _
    $region41: #{tpu_custom_call.1} parent=1 // pred_fallthru
      _
    // Predicated region
    $region42: #{tpu_custom_call.1} parent=1 // pred_check
      _
    $region43: #{tpu_custom_call.1} parent=1 // pred_check_branch
      %40 = sbr.rel (0) target = $region45
    $region44: #{tpu_custom_call.1} parent=1 // pred_region
      _
    $region45: #{tpu_custom_call.1} parent=1 // pred_fallthru
      _
    %v41 = vld [vmem:[%s0] sm:$0x1f]
    %v42 = vld [vmem:[%s0 + $0x8] sm:$0x1f]
    %v45 = vrot.slane %v41, 1
    %v46 = vrot.slane %v42, 1
    %v49 = vadd.f32 %v41, %v45
    %v50 = vadd.f32 %v42, %v46
    %v51 = vmul.f32 %v49, 0.5
    %v52 = vmul.f32 %v50, 0.5
    %v53 = vld [vmem:[%s1] sm:$0xff]
    %v54 = vld [vmem:[%s1 + $0x8] sm:$0xff]
    %v55 = vld [vmem:[%s1 + $0x10] sm:$0xff]
    %v56 = vld [vmem:[%s1 + $0x18] sm:$0xff]
    %v57 = vld [vmem:[%s1 + $0x20] sm:$0xff]
    %v58 = vld [vmem:[%s1 + $0x28] sm:$0xff]
    %v59 = vld [vmem:[%s1 + $0x30] sm:$0xff]
    %v60 = vld [vmem:[%s1 + $0x38] sm:$0xff]
    %v61 = vld [vmem:[%s2] sm:$0xff]
    %v62 = vld [vmem:[%s2 + $0x8] sm:$0xff]
    %v63 = vld [vmem:[%s2 + $0x10] sm:$0xff]
    %v64 = vld [vmem:[%s2 + $0x18] sm:$0xff]
    %v65 = vld [vmem:[%s2 + $0x20] sm:$0xff]
    %v66 = vld [vmem:[%s2 + $0x28] sm:$0xff]
    %v67 = vld [vmem:[%s2 + $0x30] sm:$0xff]
    %v68 = vld [vmem:[%s2 + $0x38] sm:$0xff]
    %70 = vset.pattern.permute.xlu0 0
    %71 = vperm.xlu0 %70, %v61
    %v72 = vpop.permute.xlu0 %71
    %75 = vset.pattern.permute.xlu0 0
    %76 = vperm.xlu0 %75, %v62
    %v77 = vpop.permute.xlu0 %76
    %80 = vset.pattern.permute.xlu0 0
    %81 = vperm.xlu0 %80, %v63
    %v82 = vpop.permute.xlu0 %81
    %85 = vset.pattern.permute.xlu0 0
    %86 = vperm.xlu0 %85, %v64
    %v87 = vpop.permute.xlu0 %86
    %90 = vset.pattern.permute.xlu0 0
    %91 = vperm.xlu0 %90, %v65
    %v92 = vpop.permute.xlu0 %91
    %95 = vset.pattern.permute.xlu0 0
    %96 = vperm.xlu0 %95, %v66
    %v97 = vpop.permute.xlu0 %96
    %100 = vset.pattern.permute.xlu0 0
    %101 = vperm.xlu0 %100, %v67
    %v102 = vpop.permute.xlu0 %101
    %105 = vset.pattern.permute.xlu0 0
    %106 = vperm.xlu0 %105, %v68
    %v107 = vpop.permute.xlu0 %106
    %vm109 = vcmask 23552
    %v111 = vsel %vm109, %v53, 0
    %v114 = vsel %vm109, %v54, 0
    %v117 = vsel %vm109, %v55, 0
    %v120 = vsel %vm109, %v56, 0
    %v123 = vsel %vm109, %v57, 0
    %v126 = vsel %vm109, %v58, 0
    %v129 = vsel %vm109, %v59, 0
    %v132 = vsel %vm109, %v60, 0
    %vm134 = vcmask 1042432
    %v135 = vsel %vm134, %v41, 0
    %v137 = vsel %vm134, %v42, 0
    %139 = vmatprep.subr.mxu0 %v137
    %140 = vmatpush1.msra.mxu0 %v135
    %141 = vmatprep.subr.mxu0 0.0
    %142 = vmatpush1.msra.mxu0 0.0
    %143 = vmatprep.subr.mxu0 0.0
    %144 = vmatpush1.msra.mxu0 0.0
    %145 = vmatprep.subr.mxu0 0.0
    %146 = vmatpush1.msra.mxu0 0.0
    %147 = vmatprep.subr.mxu0 0.0
    %148 = vmatpush1.msra.mxu0 0.0
    %149 = vmatprep.subr.mxu0 0.0
    %150 = vmatpush1.msra.mxu0 0.0
    %151 = vmatprep.subr.mxu0 0.0
    %152 = vmatpush1.msra.mxu0 0.0
    %153 = vmatprep.subr.mxu0 0.0
    %154 = vmatpush1.msra.mxu0 0.0
    %155 = vmatprep.subr.mxu0 0.0
    %156 = vmatpush1.msra.mxu0 0.0
    %157 = vmatprep.subr.mxu0 0.0
    %158 = vmatpush1.msra.mxu0 0.0
    %159 = vmatprep.subr.mxu0 0.0
    %160 = vmatpush1.msra.mxu0 0.0
    %161 = vmatprep.subr.mxu0 0.0
    %162 = vmatpush1.msra.mxu0 0.0
    %163 = vmatprep.subr.mxu0 0.0
    %164 = vmatpush1.msra.mxu0 0.0
    %165 = vmatprep.subr.mxu0 0.0
    %166 = vmatpush1.msra.mxu0 0.0
    %167 = vmatprep.subr.mxu0 0.0
    %168 = vmatpush1.msra.mxu0 0.0
    %169 = vmatprep.subr.mxu0 0.0
    %170 = vmatpush1.msra.mxu0 0.0
    %171 = vmatprep.subr.mxu0 0.0
    %172 = vmatpush1.msra.mxu0 0.0
    %173 = vmatprep.subr.mxu0 0.0
    %174 = vmatpush1.msra.mxu0 0.0
    %175 = vmatprep.subr.mxu0 0.0
    %176 = vmatpush1.msra.mxu0 0.0
    %177 = vmatprep.subr.mxu0 0.0
    %178 = vmatpush1.msra.mxu0 0.0
    %179 = vmatprep.subr.mxu0 0.0
    %180 = vmatpush1.msra.mxu0 0.0
    %181 = vmatprep.subr.mxu0 0.0
    %182 = vmatpush1.msra.mxu0 0.0
    %183 = vmatprep.subr.mxu0 0.0
    %184 = vmatpush1.msra.mxu0 0.0
    %185 = vmatprep.subr.mxu0 0.0
    %186 = vmatpush1.msra.mxu0 0.0
    %187 = vmatprep.subr.mxu0 0.0
    %188 = vmatpush1.msra.mxu0 0.0
    %189 = vmatprep.subr.mxu0 0.0
    %190 = vmatpush1.msra.mxu0 0.0
    %191 = vmatprep.subr.mxu0 0.0
    %192 = vmatpush1.msra.mxu0 0.0
    %193 = vmatprep.subr.mxu0 0.0
    %194 = vmatpush1.msra.mxu0 0.0
    %195 = vmatprep.subr.mxu0 0.0
    %196 = vmatpush1.msra.mxu0 0.0
    %197 = vmatprep.subr.mxu0 0.0
    %198 = vmatpush1.msra.mxu0 0.0
    %199 = vmatprep.subr.mxu0 0.0
    %200 = vmatpush1.msra.mxu0 0.0
    %201 = vmatprep.subr.mxu0 0.0
    %202 = vmatpush1.msra.mxu0 0.0
    %203 = vmatprep.mubr.f32.mxu0 0.0
    %204 = vmatmul.mubr.f32.gmra.mrb[0].mxu0 %v111
    %v205 = vpop.f32.mrb[0].mxu0
    %v206 = vadd.f32 %v72, %v205
    %v207 = vpop.f32.mrb[0].mxu0
    %v208 = vadd.f32 %v72, %v207
    %209 = vmatprep.mubr.f32.mxu0 0.0
    %210 = vmatmul.mubr.f32.gmra.mrb[0].mxu0 %v114
    %v211 = vpop.f32.mrb[0].mxu0
    %v212 = vadd.f32 %v77, %v211
    %v213 = vpop.f32.mrb[0].mxu0
    %v214 = vadd.f32 %v77, %v213
    %215 = vmatprep.mubr.f32.mxu0 0.0
    %216 = vmatmul.mubr.f32.gmra.mrb[0].mxu0 %v117
    %v217 = vpop.f32.mrb[0].mxu0
    %v218 = vadd.f32 %v82, %v217
    %v219 = vpop.f32.mrb[0].mxu0
    %v220 = vadd.f32 %v82, %v219
    %221 = vmatprep.mubr.f32.mxu0 0.0
    %222 = vmatmul.mubr.f32.gmra.mrb[0].mxu0 %v120
    %v223 = vpop.f32.mrb[0].mxu0
    %v224 = vadd.f32 %v87, %v223
    %v225 = vpop.f32.mrb[0].mxu0
    %v226 = vadd.f32 %v87, %v225
    %227 = vmatprep.mubr.f32.mxu0 0.0
    %228 = vmatmul.mubr.f32.gmra.mrb[0].mxu0 %v123
    %v229 = vpop.f32.mrb[0].mxu0
    %v230 = vadd.f32 %v92, %v229
    %v231 = vpop.f32.mrb[0].mxu0
    %v232 = vadd.f32 %v92, %v231
    %233 = vmatprep.mubr.f32.mxu0 0.0
    %234 = vmatmul.mubr.f32.gmra.mrb[0].mxu0 %v126
    %v235 = vpop.f32.mrb[0].mxu0
    %v236 = vadd.f32 %v97, %v235
    %v237 = vpop.f32.mrb[0].mxu0
    %v238 = vadd.f32 %v97, %v237
    %239 = vmatprep.mubr.f32.mxu0 0.0
    %240 = vmatmul.mubr.f32.gmra.mrb[0].mxu0 %v129
    %v241 = vpop.f32.mrb[0].mxu0
    %v242 = vadd.f32 %v102, %v241
    %v243 = vpop.f32.mrb[0].mxu0
    %v244 = vadd.f32 %v102, %v243
    %245 = vmatprep.mubr.f32.mxu0 0.0
    %246 = vmatmul.mubr.f32.gmra.mrb[0].mxu0 %v132
    %v247 = vpop.f32.mrb[0].mxu0
    %v248 = vadd.f32 %v107, %v247
    %v249 = vpop.f32.mrb[0].mxu0
    %v250 = vadd.f32 %v107, %v249
    %251 = vdwg.mxu0
    %v252 = vmax.f32 %v206, 0.0
    %v253 = vmax.f32 %v208, 0.0
    %v254 = vmax.f32 %v212, 0.0
    %v255 = vmax.f32 %v214, 0.0
    %v256 = vmax.f32 %v218, 0.0
    %v257 = vmax.f32 %v220, 0.0
    %v258 = vmax.f32 %v224, 0.0
    %v259 = vmax.f32 %v226, 0.0
    %v260 = vmax.f32 %v230, 0.0
    %v261 = vmax.f32 %v232, 0.0
    %v262 = vmax.f32 %v236, 0.0
    %v263 = vmax.f32 %v238, 0.0
    %v264 = vmax.f32 %v242, 0.0
    %v265 = vmax.f32 %v244, 0.0
    %v266 = vmax.f32 %v248, 0.0
    %v267 = vmax.f32 %v250, 0.0
    %v268 = vld [vmem:[%s3] sm:$0xff]
    %v269 = vld [vmem:[%s3 + $0x8] sm:$0xff]
    %v270 = vld [vmem:[%s4] sm:$0xff]
    %v271 = vld [vmem:[%s4 + $0x8] sm:$0xff]
    %273 = vset.pattern.permute.xlu0 0
    %274 = vperm.xlu0 %273, %v270
    %v275 = vpop.permute.xlu0 %274
    %278 = vset.pattern.permute.xlu0 0
    %279 = vperm.xlu0 %278, %v271
    %v280 = vpop.permute.xlu0 %279
    %vm282 = vcmask 523264
    %v284 = vsel %vm282, %v268, 0
    %v287 = vsel %vm282, %v269, 0
    %289 = vmatprep.subr.mxu0 %v253
    %290 = vmatpush1.msra.mxu0 %v252
    %291 = vmatprep.subr.mxu0 %v255
    %292 = vmatpush1.msra.mxu0 %v254
    %293 = vmatprep.subr.mxu0 %v257
    %294 = vmatpush1.msra.mxu0 %v256
    %295 = vmatprep.subr.mxu0 %v259
    %296 = vmatpush1.msra.mxu0 %v258
    %297 = vmatprep.subr.mxu0 %v261
    %298 = vmatpush1.msra.mxu0 %v260
    %299 = vmatprep.subr.mxu0 %v263
    %300 = vmatpush1.msra.mxu0 %v262
    %301 = vmatprep.subr.mxu0 %v265
    %302 = vmatpush1.msra.mxu0 %v264
    %303 = vmatprep.subr.mxu0 %v267
    %304 = vmatpush1.msra.mxu0 %v266
    %305 = vmatprep.subr.mxu0 0.0
    %306 = vmatpush1.msra.mxu0 0.0
    %307 = vmatprep.subr.mxu0 0.0
    %308 = vmatpush1.msra.mxu0 0.0
    %309 = vmatprep.subr.mxu0 0.0
    %310 = vmatpush1.msra.mxu0 0.0
    %311 = vmatprep.subr.mxu0 0.0
    %312 = vmatpush1.msra.mxu0 0.0
    %313 = vmatprep.subr.mxu0 0.0
    %314 = vmatpush1.msra.mxu0 0.0
    %315 = vmatprep.subr.mxu0 0.0
    %316 = vmatpush1.msra.mxu0 0.0
    %317 = vmatprep.subr.mxu0 0.0
    %318 = vmatpush1.msra.mxu0 0.0
    %319 = vmatprep.subr.mxu0 0.0
    %320 = vmatpush1.msra.mxu0 0.0
    %321 = vmatprep.subr.mxu0 0.0
    %322 = vmatpush1.msra.mxu0 0.0
    %323 = vmatprep.subr.mxu0 0.0
    %324 = vmatpush1.msra.mxu0 0.0
    %325 = vmatprep.subr.mxu0 0.0
    %326 = vmatpush1.msra.mxu0 0.0
    %327 = vmatprep.subr.mxu0 0.0
    %328 = vmatpush1.msra.mxu0 0.0
    %329 = vmatprep.subr.mxu0 0.0
    %330 = vmatpush1.msra.mxu0 0.0
    %331 = vmatprep.subr.mxu0 0.0
    %332 = vmatpush1.msra.mxu0 0.0
    %333 = vmatprep.subr.mxu0 0.0
    %334 = vmatpush1.msra.mxu0 0.0
    %335 = vmatprep.subr.mxu0 0.0
    %336 = vmatpush1.msra.mxu0 0.0
    %337 = vmatprep.subr.mxu0 0.0
    %338 = vmatpush1.msra.mxu0 0.0
    %339 = vmatprep.subr.mxu0 0.0
    %340 = vmatpush1.msra.mxu0 0.0
    %341 = vmatprep.subr.mxu0 0.0
    %342 = vmatpush1.msra.mxu0 0.0
    %343 = vmatprep.subr.mxu0 0.0
    %344 = vmatpush1.msra.mxu0 0.0
    %345 = vmatprep.subr.mxu0 0.0
    %346 = vmatpush1.msra.mxu0 0.0
    %347 = vmatprep.subr.mxu0 0.0
    %348 = vmatpush1.msra.mxu0 0.0
    %349 = vmatprep.subr.mxu0 0.0
    %350 = vmatpush1.msra.mxu0 0.0
    %351 = vmatprep.subr.mxu0 0.0
    %352 = vmatpush1.msra.mxu0 0.0
    %353 = vmatprep.mubr.f32.mxu0 0.0
    %354 = vmatmul.mubr.f32.gmra.mrb[0].mxu0 %v284
    %v355 = vpop.f32.mrb[0].mxu0
    %v356 = vadd.f32 %v275, %v355
    %v357 = vpop.f32.mrb[0].mxu0
    %v358 = vadd.f32 %v275, %v357
    %359 = vmatprep.mubr.f32.mxu0 0.0
    %360 = vmatmul.mubr.f32.gmra.mrb[0].mxu0 %v287
    %v361 = vpop.f32.mrb[0].mxu0
    %v362 = vadd.f32 %v280, %v361
    %v363 = vpop.f32.mrb[0].mxu0
    %v364 = vadd.f32 %v280, %v363
    %365 = vdwg.mxu0
    %v366 = vxor.u32 %v356, 2147483648
    %v367 = vxor.u32 %v358, 2147483648
    %v368 = vxor.u32 %v362, 2147483648
    %v369 = vxor.u32 %v364, 2147483648
    %v370 = vmul.f32 %v366, 1.442695
    %v371 = vpow.pop %v370
    %v372 = vmul.f32 %v367, 1.442695
    %v373 = vpow.pop %v372
    %v374 = vmul.f32 %v368, 1.442695
    %v375 = vpow.pop %v374
    %v376 = vmul.f32 %v369, 1.442695
    %v377 = vpow.pop %v376
    %v378 = vadd.f32 %v371, 1.0
    %v379 = vadd.f32 %v373, 1.0
    %v380 = vadd.f32 %v375, 1.0
    %v381 = vadd.f32 %v377, 1.0
    %v382 = vrcp.pop %v378
    %v383 = vmul.f32 1.0, %v382
    %v384 = vrcp.pop %v379
    %v385 = vmul.f32 1.0, %v384
    %v386 = vrcp.pop %v380
    %v387 = vmul.f32 1.0, %v386
    %v388 = vrcp.pop %v381
    %v389 = vmul.f32 1.0, %v388
    %v390 = vmul.f32 %v383, %v41
    %v391 = vmul.f32 %v385, %v42
    %v392 = vld [vmem:[%s5] sm:$0xff]
    %v393 = vld [vmem:[%s5 + $0x8] sm:$0xff]
    %v394 = vld [vmem:[%s5 + $0x10] sm:$0xff]
    %v395 = vld [vmem:[%s5 + $0x18] sm:$0xff]
    %397 = vset.pattern.permute.xlu0 0
    %398 = vperm.xlu0 %397, %v392
    %v399 = vpop.permute.xlu0 %398
    %402 = vset.pattern.permute.xlu0 0
    %403 = vperm.xlu0 %402, %v393
    %v404 = vpop.permute.xlu0 %403
    %407 = vset.pattern.permute.xlu0 0
    %408 = vperm.xlu0 %407, %v394
    %v409 = vpop.permute.xlu0 %408
    %412 = vset.pattern.permute.xlu0 0
    %413 = vperm.xlu0 %412, %v395
    %v414 = vpop.permute.xlu0 %413
    %416 = vset.pattern.permute.xlu0 1
    %417 = vperm.xlu0 %416, %v392
    %v418 = vpop.permute.xlu0 %417
    %420 = vset.pattern.permute.xlu0 1
    %421 = vperm.xlu0 %420, %v393
    %v422 = vpop.permute.xlu0 %421
    %424 = vset.pattern.permute.xlu0 1
    %425 = vperm.xlu0 %424, %v394
    %v426 = vpop.permute.xlu0 %425
    %428 = vset.pattern.permute.xlu0 1
    %429 = vperm.xlu0 %428, %v395
    %v430 = vpop.permute.xlu0 %429
    %432 = vset.pattern.permute.xlu0 2
    %433 = vperm.xlu0 %432, %v392
    %v434 = vpop.permute.xlu0 %433
    %436 = vset.pattern.permute.xlu0 2
    %437 = vperm.xlu0 %436, %v393
    %v438 = vpop.permute.xlu0 %437
    %440 = vset.pattern.permute.xlu0 2
    %441 = vperm.xlu0 %440, %v394
    %v442 = vpop.permute.xlu0 %441
    %444 = vset.pattern.permute.xlu0 2
    %445 = vperm.xlu0 %444, %v395
    %v446 = vpop.permute.xlu0 %445
    %448 = vset.pattern.permute.xlu0 3
    %449 = vperm.xlu0 %448, %v392
    %v450 = vpop.permute.xlu0 %449
    %452 = vset.pattern.permute.xlu0 3
    %453 = vperm.xlu0 %452, %v393
    %v454 = vpop.permute.xlu0 %453
    %456 = vset.pattern.permute.xlu0 3
    %457 = vperm.xlu0 %456, %v394
    %v458 = vpop.permute.xlu0 %457
    %460 = vset.pattern.permute.xlu0 3
    %461 = vperm.xlu0 %460, %v395
    %v462 = vpop.permute.xlu0 %461
    %v464 = vld [vmem:[%s6] sm:$0xff]
    %v465 = vld [vmem:[%s6 + $0x8] sm:$0xff]
    %v466 = vld [vmem:[%s6 + $0x10] sm:$0xff]
    %v467 = vld [vmem:[%s6 + $0x18] sm:$0xff]
    %469 = vset.pattern.permute.xlu0 0
    %470 = vperm.xlu0 %469, %v464
    %v471 = vpop.permute.xlu0 %470
    %474 = vset.pattern.permute.xlu0 0
    %475 = vperm.xlu0 %474, %v465
    %v476 = vpop.permute.xlu0 %475
    %479 = vset.pattern.permute.xlu0 0
    %480 = vperm.xlu0 %479, %v466
    %v481 = vpop.permute.xlu0 %480
    %484 = vset.pattern.permute.xlu0 0
    %485 = vperm.xlu0 %484, %v467
    %v486 = vpop.permute.xlu0 %485
    %v488 = vld [vmem:[%s8] sm:$0xff]
    %v489 = vld [vmem:[%s8 + $0x8] sm:$0xff]
    %v490 = vld [vmem:[%s8 + $0x10] sm:$0xff]
    %v491 = vld [vmem:[%s8 + $0x18] sm:$0xff]
    %493 = vset.pattern.permute.xlu0 0
    %494 = vperm.xlu0 %493, %v488
    %v495 = vpop.permute.xlu0 %494
    %498 = vset.pattern.permute.xlu0 0
    %499 = vperm.xlu0 %498, %v489
    %v500 = vpop.permute.xlu0 %499
    %503 = vset.pattern.permute.xlu0 0
    %504 = vperm.xlu0 %503, %v490
    %v505 = vpop.permute.xlu0 %504
    %508 = vset.pattern.permute.xlu0 0
    %509 = vperm.xlu0 %508, %v491
    %v510 = vpop.permute.xlu0 %509
    %v512 = vld [vmem:[%s9] sm:$0xff]
    %v513 = vld [vmem:[%s9 + $0x8] sm:$0xff]
    %v514 = vld [vmem:[%s9 + $0x10] sm:$0xff]
    %v515 = vld [vmem:[%s9 + $0x18] sm:$0xff]
    %517 = vset.pattern.permute.xlu0 0
    %518 = vperm.xlu0 %517, %v512
    %v519 = vpop.permute.xlu0 %518
    %522 = vset.pattern.permute.xlu0 0
    %523 = vperm.xlu0 %522, %v513
    %v524 = vpop.permute.xlu0 %523
    %527 = vset.pattern.permute.xlu0 0
    %528 = vperm.xlu0 %527, %v514
    %v529 = vpop.permute.xlu0 %528
    %532 = vset.pattern.permute.xlu0 0
    %533 = vperm.xlu0 %532, %v515
    %v534 = vpop.permute.xlu0 %533
    %v536 = vld [vmem:[#allocation2] sm:$0x1]
    %538 = vset.pattern.permute.xlu0 0
    %539 = vperm.xlu0 %538, %v536
    %v540 = vpop.permute.xlu0 %539
    %v542 = vlaneseq
    %v543 = vshrl.u32 %v542, 7
    %v544 = vsub.s32 0, %v543
    %v545 = vrot.slane %v540, %v544
    %v546 = vld [vmem:[%s7] sm:$0xff]
    %v547 = vld [vmem:[%s7 + $0x8] sm:$0xff]
    %v548 = vld [vmem:[%s7 + $0x10] sm:$0xff]
    %v549 = vld [vmem:[%s7 + $0x18] sm:$0xff]
    %v550 = vsub.f32 0.0, %v390
    %v551 = vsub.f32 0.0, %v391
    %v552 = vsub.f32 %v550, %v45
    %v553 = vsub.f32 %v551, %v46
    %v554 = vlaneseq
    %v555 = vshrl.u32 %v554, 7
    %v556 = vsub.s32 0, %v555
    %v557 = vrot.slane %v390, %v556
    %v558 = vlaneseq
    %v559 = vshrl.u32 %v558, 7
    %v560 = vsub.s32 0, %v559
    %v561 = vrot.slane %v391, %v560
    %v562 = vmul.f32 %v399, %v557
    %v563 = vmul.f32 %v399, %v561
    %v564 = vmul.f32 %v404, %v557
    %v565 = vmul.f32 %v404, %v561
    %v566 = vmul.f32 %v409, %v557
    %v567 = vmul.f32 %v409, %v561
    %v568 = vmul.f32 %v414, %v557
    %v569 = vmul.f32 %v414, %v561
    %v570 = vlaneseq
    %v571 = vshrl.u32 %v570, 7
    %v572 = vsub.s32 1, %v571
    %v573 = vrot.slane %v390, %v572
    %v574 = vlaneseq
    %v575 = vshrl.u32 %v574, 7
    %v576 = vsub.s32 1, %v575
    %v577 = vrot.slane %v391, %v576
    %v578 = vmul.f32 %v418, %v573
    %v579 = vmul.f32 %v418, %v577
    %v580 = vmul.f32 %v422, %v573
    %v581 = vmul.f32 %v422, %v577
    %v582 = vmul.f32 %v426, %v573
    %v583 = vmul.f32 %v426, %v577
    %v584 = vmul.f32 %v430, %v573
    %v585 = vmul.f32 %v430, %v577
    %v586 = vadd.f32 %v562, %v578
    %v587 = vadd.f32 %v563, %v579
    %v588 = vadd.f32 %v564, %v580
    %v589 = vadd.f32 %v565, %v581
    %v590 = vadd.f32 %v566, %v582
    %v591 = vadd.f32 %v567, %v583
    %v592 = vadd.f32 %v568, %v584
    %v593 = vadd.f32 %v569, %v585
    %v594 = vlaneseq
    %v595 = vshrl.u32 %v594, 7
    %v596 = vsub.s32 2, %v595
    %v597 = vrot.slane %v390, %v596
    %v598 = vlaneseq
    %v599 = vshrl.u32 %v598, 7
    %v600 = vsub.s32 2, %v599
    %v601 = vrot.slane %v391, %v600
    %v602 = vmul.f32 %v434, %v597
    %v603 = vmul.f32 %v434, %v601
    %v604 = vmul.f32 %v438, %v597
    %v605 = vmul.f32 %v438, %v601
    %v606 = vmul.f32 %v442, %v597
    %v607 = vmul.f32 %v442, %v601
    %v608 = vmul.f32 %v446, %v597
    %v609 = vmul.f32 %v446, %v601
    %v610 = vadd.f32 %v586, %v602
    %v611 = vadd.f32 %v587, %v603
    %v612 = vadd.f32 %v588, %v604
    %v613 = vadd.f32 %v589, %v605
    %v614 = vadd.f32 %v590, %v606
    %v615 = vadd.f32 %v591, %v607
    %v616 = vadd.f32 %v592, %v608
    %v617 = vadd.f32 %v593, %v609
    %v618 = vlaneseq
    %v619 = vshrl.u32 %v618, 7
    %v620 = vsub.s32 2, %v619
    %v621 = vrot.slane %v552, %v620
    %v622 = vlaneseq
    %v623 = vshrl.u32 %v622, 7
    %v624 = vsub.s32 2, %v623
    %v625 = vrot.slane %v553, %v624
    %v626 = vmul.f32 %v450, %v621
    %v627 = vmul.f32 %v450, %v625
    %v628 = vmul.f32 %v454, %v621
    %v629 = vmul.f32 %v454, %v625
    %v630 = vmul.f32 %v458, %v621
    %v631 = vmul.f32 %v458, %v625
    %v632 = vmul.f32 %v462, %v621
    %v633 = vmul.f32 %v462, %v625
    %v634 = vadd.f32 %v610, %v626
    %v635 = vadd.f32 %v611, %v627
    %v636 = vadd.f32 %v612, %v628
    %v637 = vadd.f32 %v613, %v629
    %v638 = vadd.f32 %v614, %v630
    %v639 = vadd.f32 %v615, %v631
    %v640 = vadd.f32 %v616, %v632
    %v641 = vadd.f32 %v617, %v633
    %v642 = vadd.f32 %v634, %v471
    %v643 = vadd.f32 %v635, %v471
    %v644 = vadd.f32 %v636, %v476
    %v645 = vadd.f32 %v637, %v476
    %v646 = vadd.f32 %v638, %v481
    %v647 = vadd.f32 %v639, %v481
    %v648 = vadd.f32 %v640, %v486
    %v649 = vadd.f32 %v641, %v486
    %v650 = vmax.f32 %v642, 0.0
    %v651 = vmax.f32 %v643, 0.0
    %v652 = vmax.f32 %v644, 0.0
    %v653 = vmax.f32 %v645, 0.0
    %v654 = vmax.f32 %v646, 0.0
    %v655 = vmax.f32 %v647, 0.0
    %v656 = vmax.f32 %v648, 0.0
    %v657 = vmax.f32 %v649, 0.0
    %vm658 = vcmask 261120
    %v660 = vsel %vm658, %v546, 0
    %v663 = vsel %vm658, %v547, 0
    %v666 = vsel %vm658, %v548, 0
    %v669 = vsel %vm658, %v549, 0
    %671 = vmatprep.subr.mxu0 %v651
    %672 = vmatpush1.msra.mxu0 %v650
    %673 = vmatprep.subr.mxu0 %v653
    %674 = vmatpush1.msra.mxu0 %v652
    %675 = vmatprep.subr.mxu0 %v655
    %676 = vmatpush1.msra.mxu0 %v654
    %677 = vmatprep.subr.mxu0 %v657
    %678 = vmatpush1.msra.mxu0 %v656
    %679 = vmatprep.subr.mxu0 0.0
    %680 = vmatpush1.msra.mxu0 0.0
    %681 = vmatprep.subr.mxu0 0.0
    %682 = vmatpush1.msra.mxu0 0.0
    %683 = vmatprep.subr.mxu0 0.0
    %684 = vmatpush1.msra.mxu0 0.0
    %685 = vmatprep.subr.mxu0 0.0
    %686 = vmatpush1.msra.mxu0 0.0
    %687 = vmatprep.subr.mxu0 0.0
    %688 = vmatpush1.msra.mxu0 0.0
    %689 = vmatprep.subr.mxu0 0.0
    %690 = vmatpush1.msra.mxu0 0.0
    %691 = vmatprep.subr.mxu0 0.0
    %692 = vmatpush1.msra.mxu0 0.0
    %693 = vmatprep.subr.mxu0 0.0
    %694 = vmatpush1.msra.mxu0 0.0
    %695 = vmatprep.subr.mxu0 0.0
    %696 = vmatpush1.msra.mxu0 0.0
    %697 = vmatprep.subr.mxu0 0.0
    %698 = vmatpush1.msra.mxu0 0.0
    %699 = vmatprep.subr.mxu0 0.0
    %700 = vmatpush1.msra.mxu0 0.0
    %701 = vmatprep.subr.mxu0 0.0
    %702 = vmatpush1.msra.mxu0 0.0
    %703 = vmatprep.subr.mxu0 0.0
    %704 = vmatpush1.msra.mxu0 0.0
    %705 = vmatprep.subr.mxu0 0.0
    %706 = vmatpush1.msra.mxu0 0.0
    %707 = vmatprep.subr.mxu0 0.0
    %708 = vmatpush1.msra.mxu0 0.0
    %709 = vmatprep.subr.mxu0 0.0
    %710 = vmatpush1.msra.mxu0 0.0
    %711 = vmatprep.subr.mxu0 0.0
    %712 = vmatpush1.msra.mxu0 0.0
    %713 = vmatprep.subr.mxu0 0.0
    %714 = vmatpush1.msra.mxu0 0.0
    %715 = vmatprep.subr.mxu0 0.0
    %716 = vmatpush1.msra.mxu0 0.0
    %717 = vmatprep.subr.mxu0 0.0
    %718 = vmatpush1.msra.mxu0 0.0
    %719 = vmatprep.subr.mxu0 0.0
    %720 = vmatpush1.msra.mxu0 0.0
    %721 = vmatprep.subr.mxu0 0.0
    %722 = vmatpush1.msra.mxu0 0.0
    %723 = vmatprep.subr.mxu0 0.0
    %724 = vmatpush1.msra.mxu0 0.0
    %725 = vmatprep.subr.mxu0 0.0
    %726 = vmatpush1.msra.mxu0 0.0
    %727 = vmatprep.subr.mxu0 0.0
    %728 = vmatpush1.msra.mxu0 0.0
    %729 = vmatprep.subr.mxu0 0.0
    %730 = vmatpush1.msra.mxu0 0.0
    %731 = vmatprep.subr.mxu0 0.0
    %732 = vmatpush1.msra.mxu0 0.0
    %733 = vmatprep.subr.mxu0 0.0
    %734 = vmatpush1.msra.mxu0 0.0
    %735 = vmatprep.mubr.f32.mxu0 0.0
    %736 = vmatmul.mubr.f32.gmra.mrb[0].mxu0 %v660
    %v737 = vpop.f32.mrb[0].mxu0
    %v738 = vadd.f32 %v495, %v737
    %v739 = vpop.f32.mrb[0].mxu0
    %v740 = vadd.f32 %v495, %v739
    %741 = vmatprep.mubr.f32.mxu0 0.0
    %742 = vmatmul.mubr.f32.gmra.mrb[0].mxu0 %v663
    %v743 = vpop.f32.mrb[0].mxu0
    %v744 = vadd.f32 %v500, %v743
    %v745 = vpop.f32.mrb[0].mxu0
    %v746 = vadd.f32 %v500, %v745
    %747 = vmatprep.mubr.f32.mxu0 0.0
    %748 = vmatmul.mubr.f32.gmra.mrb[0].mxu0 %v666
    %v749 = vpop.f32.mrb[0].mxu0
    %v750 = vadd.f32 %v505, %v749
    %v751 = vpop.f32.mrb[0].mxu0
    %v752 = vadd.f32 %v505, %v751
    %753 = vmatprep.mubr.f32.mxu0 0.0
    %754 = vmatmul.mubr.f32.gmra.mrb[0].mxu0 %v669
    %v755 = vpop.f32.mrb[0].mxu0
    %v756 = vadd.f32 %v510, %v755
    %v757 = vpop.f32.mrb[0].mxu0
    %v758 = vadd.f32 %v510, %v757
    %759 = vdwg.mxu0
    %v760 = vmax.f32 %v738, 0.0
    %v761 = vmax.f32 %v740, 0.0
    %v762 = vmax.f32 %v744, 0.0
    %v763 = vmax.f32 %v746, 0.0
    %v764 = vmax.f32 %v750, 0.0
    %v765 = vmax.f32 %v752, 0.0
    %v766 = vmax.f32 %v756, 0.0
    %v767 = vmax.f32 %v758, 0.0
    %v768 = vmul.f32 %v519, %v760
    %v769 = vmul.f32 %v519, %v761
    %v770 = vmul.f32 %v524, %v762
    %v771 = vmul.f32 %v524, %v763
    %v772 = vmul.f32 %v529, %v764
    %v773 = vmul.f32 %v529, %v765
    %v774 = vmul.f32 %v534, %v766
    %v775 = vmul.f32 %v534, %v767
    %v776 = vadd.f32 %v768, %v770
    %v777 = vadd.f32 %v776, %v772
    %v778 = vadd.f32 %v777, %v774
    %v779 = vrot.slane %v778, 4
    %v780 = vadd.f32 %v778, %v779
    %v781 = vrot.slane %v780, 2
    %v782 = vadd.f32 %v780, %v781
    %v783 = vrot.slane %v782, 1
    %v784 = vadd.f32 %v782, %v783
    %v785 = vadd.f32 %v769, %v771
    %v786 = vadd.f32 %v785, %v773
    %v787 = vadd.f32 %v786, %v775
    %v788 = vrot.slane %v787, 4
    %v789 = vadd.f32 %v787, %v788
    %v790 = vrot.slane %v789, 2
    %v791 = vadd.f32 %v789, %v790
    %v792 = vrot.slane %v791, 1
    %v793 = vadd.f32 %v791, %v792
    %v794 = vadd.f32 %v784, %v545
    %v795 = vadd.f32 %v793, %v545
    %v796 = vmul.f32 %v390, 0.005
    %v797 = vmul.f32 %v391, 0.005
    %v800 = vrot.slane %v796, 1
    %v801 = vrot.slane %v797, 1
    %v804 = vadd.f32 %v390, %v800
    %v805 = vadd.f32 %v391, %v801
    %v806 = vmul.f32 %v552, 0.005
    %v807 = vmul.f32 %v553, 0.005
    %v810 = vrot.slane %v806, 1
    %v811 = vrot.slane %v807, 1
    %v814 = vadd.f32 %v390, %v810
    %v815 = vadd.f32 %v391, %v811
    %v816 = vmul.f32 %v794, 0.005
    %v817 = vmul.f32 %v795, 0.005
    %v818 = vadd.f32 %v390, %v816
    %v819 = vadd.f32 %v391, %v817
    %v820 = vsub.f32 0.0, %v818
    %v821 = vsub.f32 0.0, %v819
    %v824 = vrot.slane %v51, 1
    %v825 = vrot.slane %v52, 1
    %v828 = vsub.f32 %v820, %v824
    %v829 = vsub.f32 %v821, %v825
    %v830 = vlaneseq
    %v831 = vshrl.u32 %v830, 7
    %v832 = vsub.s32 0, %v831
    %v833 = vrot.slane %v804, %v832
    %v834 = vlaneseq
    %v835 = vshrl.u32 %v834, 7
    %v836 = vsub.s32 0, %v835
    %v837 = vrot.slane %v805, %v836
    %v838 = vmul.f32 %v399, %v833
    %v839 = vmul.f32 %v399, %v837
    %v840 = vmul.f32 %v404, %v833
    %v841 = vmul.f32 %v404, %v837
    %v842 = vmul.f32 %v409, %v833
    %v843 = vmul.f32 %v409, %v837
    %v844 = vmul.f32 %v414, %v833
    %v845 = vmul.f32 %v414, %v837
    %v846 = vlaneseq
    %v847 = vshrl.u32 %v846, 7
    %v848 = vsub.s32 1, %v847
    %v849 = vrot.slane %v814, %v848
    %v850 = vlaneseq
    %v851 = vshrl.u32 %v850, 7
    %v852 = vsub.s32 1, %v851
    %v853 = vrot.slane %v815, %v852
    %v854 = vmul.f32 %v418, %v849
    %v855 = vmul.f32 %v418, %v853
    %v856 = vmul.f32 %v422, %v849
    %v857 = vmul.f32 %v422, %v853
    %v858 = vmul.f32 %v426, %v849
    %v859 = vmul.f32 %v426, %v853
    %v860 = vmul.f32 %v430, %v849
    %v861 = vmul.f32 %v430, %v853
    %v862 = vadd.f32 %v838, %v854
    %v863 = vadd.f32 %v839, %v855
    %v864 = vadd.f32 %v840, %v856
    %v865 = vadd.f32 %v841, %v857
    %v866 = vadd.f32 %v842, %v858
    %v867 = vadd.f32 %v843, %v859
    %v868 = vadd.f32 %v844, %v860
    %v869 = vadd.f32 %v845, %v861
    %v870 = vlaneseq
    %v871 = vshrl.u32 %v870, 7
    %v872 = vsub.s32 2, %v871
    %v873 = vrot.slane %v818, %v872
    %v874 = vlaneseq
    %v875 = vshrl.u32 %v874, 7
    %v876 = vsub.s32 2, %v875
    %v877 = vrot.slane %v819, %v876
    %v878 = vmul.f32 %v434, %v873
    %v879 = vmul.f32 %v434, %v877
    %v880 = vmul.f32 %v438, %v873
    %v881 = vmul.f32 %v438, %v877
    %v882 = vmul.f32 %v442, %v873
    %v883 = vmul.f32 %v442, %v877
    %v884 = vmul.f32 %v446, %v873
    %v885 = vmul.f32 %v446, %v877
    %v886 = vadd.f32 %v862, %v878
    %v887 = vadd.f32 %v863, %v879
    %v888 = vadd.f32 %v864, %v880
    %v889 = vadd.f32 %v865, %v881
    %v890 = vadd.f32 %v866, %v882
    %v891 = vadd.f32 %v867, %v883
    %v892 = vadd.f32 %v868, %v884
    %v893 = vadd.f32 %v869, %v885
    %v894 = vlaneseq
    %v895 = vshrl.u32 %v894, 7
    %v896 = vsub.s32 2, %v895
    %v897 = vrot.slane %v828, %v896
    %v898 = vlaneseq
    %v899 = vshrl.u32 %v898, 7
    %v900 = vsub.s32 2, %v899
    %v901 = vrot.slane %v829, %v900
    %v902 = vmul.f32 %v450, %v897
    %v903 = vmul.f32 %v450, %v901
    %v904 = vmul.f32 %v454, %v897
    %v905 = vmul.f32 %v454, %v901
    %v906 = vmul.f32 %v458, %v897
    %v907 = vmul.f32 %v458, %v901
    %v908 = vmul.f32 %v462, %v897
    %v909 = vmul.f32 %v462, %v901
    %v910 = vadd.f32 %v886, %v902
    %v911 = vadd.f32 %v887, %v903
    %v912 = vadd.f32 %v888, %v904
    %v913 = vadd.f32 %v889, %v905
    %v914 = vadd.f32 %v890, %v906
    %v915 = vadd.f32 %v891, %v907
    %v916 = vadd.f32 %v892, %v908
    %v917 = vadd.f32 %v893, %v909
    %v918 = vadd.f32 %v910, %v471
    %v919 = vadd.f32 %v911, %v471
    %v920 = vadd.f32 %v912, %v476
    %v921 = vadd.f32 %v913, %v476
    %v922 = vadd.f32 %v914, %v481
    %v923 = vadd.f32 %v915, %v481
    %v924 = vadd.f32 %v916, %v486
    %v925 = vadd.f32 %v917, %v486
    %v926 = vmax.f32 %v918, 0.0
    %v927 = vmax.f32 %v919, 0.0
    %v928 = vmax.f32 %v920, 0.0
    %v929 = vmax.f32 %v921, 0.0
    %v930 = vmax.f32 %v922, 0.0
    %v931 = vmax.f32 %v923, 0.0
    %v932 = vmax.f32 %v924, 0.0
    %v933 = vmax.f32 %v925, 0.0
    %934 = vmatprep.subr.mxu0 %v927
    %935 = vmatpush1.msra.mxu0 %v926
    %936 = vmatprep.subr.mxu0 %v929
    %937 = vmatpush1.msra.mxu0 %v928
    %938 = vmatprep.subr.mxu0 %v931
    %939 = vmatpush1.msra.mxu0 %v930
    %940 = vmatprep.subr.mxu0 %v933
    %941 = vmatpush1.msra.mxu0 %v932
    %942 = vmatprep.subr.mxu0 0.0
    %943 = vmatpush1.msra.mxu0 0.0
    %944 = vmatprep.subr.mxu0 0.0
    %945 = vmatpush1.msra.mxu0 0.0
    %946 = vmatprep.subr.mxu0 0.0
    %947 = vmatpush1.msra.mxu0 0.0
    %948 = vmatprep.subr.mxu0 0.0
    %949 = vmatpush1.msra.mxu0 0.0
    %950 = vmatprep.subr.mxu0 0.0
    %951 = vmatpush1.msra.mxu0 0.0
    %952 = vmatprep.subr.mxu0 0.0
    %953 = vmatpush1.msra.mxu0 0.0
    %954 = vmatprep.subr.mxu0 0.0
    %955 = vmatpush1.msra.mxu0 0.0
    %956 = vmatprep.subr.mxu0 0.0
    %957 = vmatpush1.msra.mxu0 0.0
    %958 = vmatprep.subr.mxu0 0.0
    %959 = vmatpush1.msra.mxu0 0.0
    %960 = vmatprep.subr.mxu0 0.0
    %961 = vmatpush1.msra.mxu0 0.0
    %962 = vmatprep.subr.mxu0 0.0
    %963 = vmatpush1.msra.mxu0 0.0
    %964 = vmatprep.subr.mxu0 0.0
    %965 = vmatpush1.msra.mxu0 0.0
    %966 = vmatprep.subr.mxu0 0.0
    %967 = vmatpush1.msra.mxu0 0.0
    %968 = vmatprep.subr.mxu0 0.0
    %969 = vmatpush1.msra.mxu0 0.0
    %970 = vmatprep.subr.mxu0 0.0
    %971 = vmatpush1.msra.mxu0 0.0
    %972 = vmatprep.subr.mxu0 0.0
    %973 = vmatpush1.msra.mxu0 0.0
    %974 = vmatprep.subr.mxu0 0.0
    %975 = vmatpush1.msra.mxu0 0.0
    %976 = vmatprep.subr.mxu0 0.0
    %977 = vmatpush1.msra.mxu0 0.0
    %978 = vmatprep.subr.mxu0 0.0
    %979 = vmatpush1.msra.mxu0 0.0
    %980 = vmatprep.subr.mxu0 0.0
    %981 = vmatpush1.msra.mxu0 0.0
    %982 = vmatprep.subr.mxu0 0.0
    %983 = vmatpush1.msra.mxu0 0.0
    %984 = vmatprep.subr.mxu0 0.0
    %985 = vmatpush1.msra.mxu0 0.0
    %986 = vmatprep.subr.mxu0 0.0
    %987 = vmatpush1.msra.mxu0 0.0
    %988 = vmatprep.subr.mxu0 0.0
    %989 = vmatpush1.msra.mxu0 0.0
    %990 = vmatprep.subr.mxu0 0.0
    %991 = vmatpush1.msra.mxu0 0.0
    %992 = vmatprep.subr.mxu0 0.0
    %993 = vmatpush1.msra.mxu0 0.0
    %994 = vmatprep.subr.mxu0 0.0
    %995 = vmatpush1.msra.mxu0 0.0
    %996 = vmatprep.subr.mxu0 0.0
    %997 = vmatpush1.msra.mxu0 0.0
    %998 = vmatprep.mubr.f32.mxu0 0.0
    %999 = vmatmul.mubr.f32.gmra.mrb[0].mxu0 %v660
    %v1000 = vpop.f32.mrb[0].mxu0
    %v1001 = vadd.f32 %v495, %v1000
    %v1002 = vpop.f32.mrb[0].mxu0
    %v1003 = vadd.f32 %v495, %v1002
    %1004 = vmatprep.mubr.f32.mxu0 0.0
    %1005 = vmatmul.mubr.f32.gmra.mrb[0].mxu0 %v663
    %v1006 = vpop.f32.mrb[0].mxu0
    %v1007 = vadd.f32 %v500, %v1006
    %v1008 = vpop.f32.mrb[0].mxu0
    %v1009 = vadd.f32 %v500, %v1008
    %1010 = vmatprep.mubr.f32.mxu0 0.0
    %1011 = vmatmul.mubr.f32.gmra.mrb[0].mxu0 %v666
    %v1012 = vpop.f32.mrb[0].mxu0
    %v1013 = vadd.f32 %v505, %v1012
    %v1014 = vpop.f32.mrb[0].mxu0
    %v1015 = vadd.f32 %v505, %v1014
    %1016 = vmatprep.mubr.f32.mxu0 0.0
    %1017 = vmatmul.mubr.f32.gmra.mrb[0].mxu0 %v669
    %v1018 = vpop.f32.mrb[0].mxu0
    %v1019 = vadd.f32 %v510, %v1018
    %v1020 = vpop.f32.mrb[0].mxu0
    %v1021 = vadd.f32 %v510, %v1020
    %1022 = vdwg.mxu0
    %v1023 = vmax.f32 %v1001, 0.0
    %v1024 = vmax.f32 %v1003, 0.0
    %v1025 = vmax.f32 %v1007, 0.0
    %v1026 = vmax.f32 %v1009, 0.0
    %v1027 = vmax.f32 %v1013, 0.0
    %v1028 = vmax.f32 %v1015, 0.0
    %v1029 = vmax.f32 %v1019, 0.0
    %v1030 = vmax.f32 %v1021, 0.0
    %v1031 = vmul.f32 %v519, %v1023
    %v1032 = vmul.f32 %v519, %v1024
    %v1033 = vmul.f32 %v524, %v1025
    %v1034 = vmul.f32 %v524, %v1026
    %v1035 = vmul.f32 %v529, %v1027
    %v1036 = vmul.f32 %v529, %v1028
    %v1037 = vmul.f32 %v534, %v1029
    %v1038 = vmul.f32 %v534, %v1030
    %v1039 = vadd.f32 %v1031, %v1033
    %v1040 = vadd.f32 %v1039, %v1035
    %v1041 = vadd.f32 %v1040, %v1037
    %v1042 = vrot.slane %v1041, 4
    %v1043 = vadd.f32 %v1041, %v1042
    %v1044 = vrot.slane %v1043, 2
    %v1045 = vadd.f32 %v1043, %v1044
    %v1046 = vrot.slane %v1045, 1
    %v1047 = vadd.f32 %v1045, %v1046
    %v1048 = vadd.f32 %v1032, %v1034
    %v1049 = vadd.f32 %v1048, %v1036
    %v1050 = vadd.f32 %v1049, %v1038
    %v1051 = vrot.slane %v1050, 4
    %v1052 = vadd.f32 %v1050, %v1051
    %v1053 = vrot.slane %v1052, 2
    %v1054 = vadd.f32 %v1052, %v1053
    %v1055 = vrot.slane %v1054, 1
    %v1056 = vadd.f32 %v1054, %v1055
    %v1057 = vadd.f32 %v1047, %v545
    %v1058 = vadd.f32 %v1056, %v545
    %v1059 = vmul.f32 %v814, 0.005
    %v1060 = vmul.f32 %v815, 0.005
    %v1063 = vrot.slane %v1059, 1
    %v1064 = vrot.slane %v1060, 1
    %v1067 = vadd.f32 %v390, %v1063
    %v1068 = vadd.f32 %v391, %v1064
    %v1069 = vmul.f32 %v828, 0.005
    %v1070 = vmul.f32 %v829, 0.005
    %v1073 = vrot.slane %v1069, 1
    %v1074 = vrot.slane %v1070, 1
    %v1077 = vadd.f32 %v390, %v1073
    %v1078 = vadd.f32 %v391, %v1074
    %v1079 = vmul.f32 %v1057, 0.005
    %v1080 = vmul.f32 %v1058, 0.005
    %v1081 = vadd.f32 %v390, %v1079
    %v1082 = vadd.f32 %v391, %v1080
    %v1083 = vsub.f32 0.0, %v1081
    %v1084 = vsub.f32 0.0, %v1082
    %v1085 = vsub.f32 %v1083, %v824
    %v1086 = vsub.f32 %v1084, %v825
    %v1087 = vlaneseq
    %v1088 = vshrl.u32 %v1087, 7
    %v1089 = vsub.s32 0, %v1088
    %v1090 = vrot.slane %v1067, %v1089
    %v1091 = vlaneseq
    %v1092 = vshrl.u32 %v1091, 7
    %v1093 = vsub.s32 0, %v1092
    %v1094 = vrot.slane %v1068, %v1093
    %v1095 = vmul.f32 %v399, %v1090
    %v1096 = vmul.f32 %v399, %v1094
    %v1097 = vmul.f32 %v404, %v1090
    %v1098 = vmul.f32 %v404, %v1094
    %v1099 = vmul.f32 %v409, %v1090
    %v1100 = vmul.f32 %v409, %v1094
    %v1101 = vmul.f32 %v414, %v1090
    %v1102 = vmul.f32 %v414, %v1094
    %v1103 = vlaneseq
    %v1104 = vshrl.u32 %v1103, 7
    %v1105 = vsub.s32 1, %v1104
    %v1106 = vrot.slane %v1077, %v1105
    %v1107 = vlaneseq
    %v1108 = vshrl.u32 %v1107, 7
    %v1109 = vsub.s32 1, %v1108
    %v1110 = vrot.slane %v1078, %v1109
    %v1111 = vmul.f32 %v418, %v1106
    %v1112 = vmul.f32 %v418, %v1110
    %v1113 = vmul.f32 %v422, %v1106
    %v1114 = vmul.f32 %v422, %v1110
    %v1115 = vmul.f32 %v426, %v1106
    %v1116 = vmul.f32 %v426, %v1110
    %v1117 = vmul.f32 %v430, %v1106
    %v1118 = vmul.f32 %v430, %v1110
    %v1119 = vadd.f32 %v1095, %v1111
    %v1120 = vadd.f32 %v1096, %v1112
    %v1121 = vadd.f32 %v1097, %v1113
    %v1122 = vadd.f32 %v1098, %v1114
    %v1123 = vadd.f32 %v1099, %v1115
    %v1124 = vadd.f32 %v1100, %v1116
    %v1125 = vadd.f32 %v1101, %v1117
    %v1126 = vadd.f32 %v1102, %v1118
    %v1127 = vlaneseq
    %v1128 = vshrl.u32 %v1127, 7
    %v1129 = vsub.s32 2, %v1128
    %v1130 = vrot.slane %v1081, %v1129
    %v1131 = vlaneseq
    %v1132 = vshrl.u32 %v1131, 7
    %v1133 = vsub.s32 2, %v1132
    %v1134 = vrot.slane %v1082, %v1133
    %v1135 = vmul.f32 %v434, %v1130
    %v1136 = vmul.f32 %v434, %v1134
    %v1137 = vmul.f32 %v438, %v1130
    %v1138 = vmul.f32 %v438, %v1134
    %v1139 = vmul.f32 %v442, %v1130
    %v1140 = vmul.f32 %v442, %v1134
    %v1141 = vmul.f32 %v446, %v1130
    %v1142 = vmul.f32 %v446, %v1134
    %v1143 = vadd.f32 %v1119, %v1135
    %v1144 = vadd.f32 %v1120, %v1136
    %v1145 = vadd.f32 %v1121, %v1137
    %v1146 = vadd.f32 %v1122, %v1138
    %v1147 = vadd.f32 %v1123, %v1139
    %v1148 = vadd.f32 %v1124, %v1140
    %v1149 = vadd.f32 %v1125, %v1141
    %v1150 = vadd.f32 %v1126, %v1142
    %v1151 = vlaneseq
    %v1152 = vshrl.u32 %v1151, 7
    %v1153 = vsub.s32 2, %v1152
    %v1154 = vrot.slane %v1085, %v1153
    %v1155 = vlaneseq
    %v1156 = vshrl.u32 %v1155, 7
    %v1157 = vsub.s32 2, %v1156
    %v1158 = vrot.slane %v1086, %v1157
    %v1159 = vmul.f32 %v450, %v1154
    %v1160 = vmul.f32 %v450, %v1158
    %v1161 = vmul.f32 %v454, %v1154
    %v1162 = vmul.f32 %v454, %v1158
    %v1163 = vmul.f32 %v458, %v1154
    %v1164 = vmul.f32 %v458, %v1158
    %v1165 = vmul.f32 %v462, %v1154
    %v1166 = vmul.f32 %v462, %v1158
    %v1167 = vadd.f32 %v1143, %v1159
    %v1168 = vadd.f32 %v1144, %v1160
    %v1169 = vadd.f32 %v1145, %v1161
    %v1170 = vadd.f32 %v1146, %v1162
    %v1171 = vadd.f32 %v1147, %v1163
    %v1172 = vadd.f32 %v1148, %v1164
    %v1173 = vadd.f32 %v1149, %v1165
    %v1174 = vadd.f32 %v1150, %v1166
    %v1175 = vadd.f32 %v1167, %v471
    %v1176 = vadd.f32 %v1168, %v471
    %v1177 = vadd.f32 %v1169, %v476
    %v1178 = vadd.f32 %v1170, %v476
    %v1179 = vadd.f32 %v1171, %v481
    %v1180 = vadd.f32 %v1172, %v481
    %v1181 = vadd.f32 %v1173, %v486
    %v1182 = vadd.f32 %v1174, %v486
    %v1183 = vmax.f32 %v1175, 0.0
    %v1184 = vmax.f32 %v1176, 0.0
    %v1185 = vmax.f32 %v1177, 0.0
    %v1186 = vmax.f32 %v1178, 0.0
    %v1187 = vmax.f32 %v1179, 0.0
    %v1188 = vmax.f32 %v1180, 0.0
    %v1189 = vmax.f32 %v1181, 0.0
    %v1190 = vmax.f32 %v1182, 0.0
    %1191 = vmatprep.subr.mxu0 %v1184
    %1192 = vmatpush1.msra.mxu0 %v1183
    %1193 = vmatprep.subr.mxu0 %v1186
    %1194 = vmatpush1.msra.mxu0 %v1185
    %1195 = vmatprep.subr.mxu0 %v1188
    %1196 = vmatpush1.msra.mxu0 %v1187
    %1197 = vmatprep.subr.mxu0 %v1190
    %1198 = vmatpush1.msra.mxu0 %v1189
    %1199 = vmatprep.subr.mxu0 0.0
    %1200 = vmatpush1.msra.mxu0 0.0
    %1201 = vmatprep.subr.mxu0 0.0
    %1202 = vmatpush1.msra.mxu0 0.0
    %1203 = vmatprep.subr.mxu0 0.0
    %1204 = vmatpush1.msra.mxu0 0.0
    %1205 = vmatprep.subr.mxu0 0.0
    %1206 = vmatpush1.msra.mxu0 0.0
    %1207 = vmatprep.subr.mxu0 0.0
    %1208 = vmatpush1.msra.mxu0 0.0
    %1209 = vmatprep.subr.mxu0 0.0
    %1210 = vmatpush1.msra.mxu0 0.0
    %1211 = vmatprep.subr.mxu0 0.0
    %1212 = vmatpush1.msra.mxu0 0.0
    %1213 = vmatprep.subr.mxu0 0.0
    %1214 = vmatpush1.msra.mxu0 0.0
    %1215 = vmatprep.subr.mxu0 0.0
    %1216 = vmatpush1.msra.mxu0 0.0
    %1217 = vmatprep.subr.mxu0 0.0
    %1218 = vmatpush1.msra.mxu0 0.0
    %1219 = vmatprep.subr.mxu0 0.0
    %1220 = vmatpush1.msra.mxu0 0.0
    %1221 = vmatprep.subr.mxu0 0.0
    %1222 = vmatpush1.msra.mxu0 0.0
    %1223 = vmatprep.subr.mxu0 0.0
    %1224 = vmatpush1.msra.mxu0 0.0
    %1225 = vmatprep.subr.mxu0 0.0
    %1226 = vmatpush1.msra.mxu0 0.0
    %1227 = vmatprep.subr.mxu0 0.0
    %1228 = vmatpush1.msra.mxu0 0.0
    %1229 = vmatprep.subr.mxu0 0.0
    %1230 = vmatpush1.msra.mxu0 0.0
    %1231 = vmatprep.subr.mxu0 0.0
    %1232 = vmatpush1.msra.mxu0 0.0
    %1233 = vmatprep.subr.mxu0 0.0
    %1234 = vmatpush1.msra.mxu0 0.0
    %1235 = vmatprep.subr.mxu0 0.0
    %1236 = vmatpush1.msra.mxu0 0.0
    %1237 = vmatprep.subr.mxu0 0.0
    %1238 = vmatpush1.msra.mxu0 0.0
    %1239 = vmatprep.subr.mxu0 0.0
    %1240 = vmatpush1.msra.mxu0 0.0
    %1241 = vmatprep.subr.mxu0 0.0
    %1242 = vmatpush1.msra.mxu0 0.0
    %1243 = vmatprep.subr.mxu0 0.0
    %1244 = vmatpush1.msra.mxu0 0.0
    %1245 = vmatprep.subr.mxu0 0.0
    %1246 = vmatpush1.msra.mxu0 0.0
    %1247 = vmatprep.subr.mxu0 0.0
    %1248 = vmatpush1.msra.mxu0 0.0
    %1249 = vmatprep.subr.mxu0 0.0
    %1250 = vmatpush1.msra.mxu0 0.0
    %1251 = vmatprep.subr.mxu0 0.0
    %1252 = vmatpush1.msra.mxu0 0.0
    %1253 = vmatprep.subr.mxu0 0.0
    %1254 = vmatpush1.msra.mxu0 0.0
    %1255 = vmatprep.mubr.f32.mxu0 0.0
    %1256 = vmatmul.mubr.f32.gmra.mrb[0].mxu0 %v660
    %v1257 = vpop.f32.mrb[0].mxu0
    %v1258 = vadd.f32 %v495, %v1257
    %v1259 = vpop.f32.mrb[0].mxu0
    %v1260 = vadd.f32 %v495, %v1259
    %1261 = vmatprep.mubr.f32.mxu0 0.0
    %1262 = vmatmul.mubr.f32.gmra.mrb[0].mxu0 %v663
    %v1263 = vpop.f32.mrb[0].mxu0
    %v1264 = vadd.f32 %v500, %v1263
    %v1265 = vpop.f32.mrb[0].mxu0
    %v1266 = vadd.f32 %v500, %v1265
    %1267 = vmatprep.mubr.f32.mxu0 0.0
    %1268 = vmatmul.mubr.f32.gmra.mrb[0].mxu0 %v666
    %v1269 = vpop.f32.mrb[0].mxu0
    %v1270 = vadd.f32 %v505, %v1269
    %v1271 = vpop.f32.mrb[0].mxu0
    %v1272 = vadd.f32 %v505, %v1271
    %1273 = vmatprep.mubr.f32.mxu0 0.0
    %1274 = vmatmul.mubr.f32.gmra.mrb[0].mxu0 %v669
    %v1275 = vpop.f32.mrb[0].mxu0
    %v1276 = vadd.f32 %v510, %v1275
    %v1277 = vpop.f32.mrb[0].mxu0
    %v1278 = vadd.f32 %v510, %v1277
    %1279 = vdwg.mxu0
    %v1280 = vmax.f32 %v1258, 0.0
    %v1281 = vmax.f32 %v1260, 0.0
    %v1282 = vmax.f32 %v1264, 0.0
    %v1283 = vmax.f32 %v1266, 0.0
    %v1284 = vmax.f32 %v1270, 0.0
    %v1285 = vmax.f32 %v1272, 0.0
    %v1286 = vmax.f32 %v1276, 0.0
    %v1287 = vmax.f32 %v1278, 0.0
    %v1288 = vmul.f32 %v519, %v1280
    %v1289 = vmul.f32 %v519, %v1281
    %v1290 = vmul.f32 %v524, %v1282
    %v1291 = vmul.f32 %v524, %v1283
    %v1292 = vmul.f32 %v529, %v1284
    %v1293 = vmul.f32 %v529, %v1285
    %v1294 = vmul.f32 %v534, %v1286
    %v1295 = vmul.f32 %v534, %v1287
    %v1296 = vadd.f32 %v1288, %v1290
    %v1297 = vadd.f32 %v1296, %v1292
    %v1298 = vadd.f32 %v1297, %v1294
    %v1299 = vrot.slane %v1298, 4
    %v1300 = vadd.f32 %v1298, %v1299
    %v1301 = vrot.slane %v1300, 2
    %v1302 = vadd.f32 %v1300, %v1301
    %v1303 = vrot.slane %v1302, 1
    %v1304 = vadd.f32 %v1302, %v1303
    %v1305 = vadd.f32 %v1289, %v1291
    %v1306 = vadd.f32 %v1305, %v1293
    %v1307 = vadd.f32 %v1306, %v1295
    %v1308 = vrot.slane %v1307, 4
    %v1309 = vadd.f32 %v1307, %v1308
    %v1310 = vrot.slane %v1309, 2
    %v1311 = vadd.f32 %v1309, %v1310
    %v1312 = vrot.slane %v1311, 1
    %v1313 = vadd.f32 %v1311, %v1312
    %v1314 = vadd.f32 %v1304, %v545
    %v1315 = vadd.f32 %v1313, %v545
    %v1316 = vmul.f32 %v1077, 0.01
    %v1317 = vmul.f32 %v1078, 0.01
    %v1320 = vrot.slane %v1316, 1
    %v1321 = vrot.slane %v1317, 1
    %v1324 = vadd.f32 %v390, %v1320
    %v1325 = vadd.f32 %v391, %v1321
    %v1326 = vmul.f32 %v1085, 0.01
    %v1327 = vmul.f32 %v1086, 0.01
    %v1330 = vrot.slane %v1326, 1
    %v1331 = vrot.slane %v1327, 1
    %v1334 = vadd.f32 %v390, %v1330
    %v1335 = vadd.f32 %v391, %v1331
    %v1336 = vmul.f32 %v1314, 0.01
    %v1337 = vmul.f32 %v1315, 0.01
    %v1338 = vadd.f32 %v390, %v1336
    %v1339 = vadd.f32 %v391, %v1337
    %v1340 = vsub.f32 0.0, %v1338
    %v1341 = vsub.f32 0.0, %v1339
    %v1342 = vrot.slane %v41, 2
    %v1343 = vrot.slane %v42, 2
    %v1346 = vsub.f32 %v1340, %v1342
    %v1347 = vsub.f32 %v1341, %v1343
    %v1348 = vlaneseq
    %v1349 = vshrl.u32 %v1348, 7
    %v1350 = vsub.s32 0, %v1349
    %v1351 = vrot.slane %v1324, %v1350
    %v1352 = vlaneseq
    %v1353 = vshrl.u32 %v1352, 7
    %v1354 = vsub.s32 0, %v1353
    %v1355 = vrot.slane %v1325, %v1354
    %v1356 = vmul.f32 %v399, %v1351
    %v1357 = vmul.f32 %v399, %v1355
    %v1358 = vmul.f32 %v404, %v1351
    %v1359 = vmul.f32 %v404, %v1355
    %v1360 = vmul.f32 %v409, %v1351
    %v1361 = vmul.f32 %v409, %v1355
    %v1362 = vmul.f32 %v414, %v1351
    %v1363 = vmul.f32 %v414, %v1355
    %v1364 = vlaneseq
    %v1365 = vshrl.u32 %v1364, 7
    %v1366 = vsub.s32 1, %v1365
    %v1367 = vrot.slane %v1334, %v1366
    %v1368 = vlaneseq
    %v1369 = vshrl.u32 %v1368, 7
    %v1370 = vsub.s32 1, %v1369
    %v1371 = vrot.slane %v1335, %v1370
    %v1372 = vmul.f32 %v418, %v1367
    %v1373 = vmul.f32 %v418, %v1371
    %v1374 = vmul.f32 %v422, %v1367
    %v1375 = vmul.f32 %v422, %v1371
    %v1376 = vmul.f32 %v426, %v1367
    %v1377 = vmul.f32 %v426, %v1371
    %v1378 = vmul.f32 %v430, %v1367
    %v1379 = vmul.f32 %v430, %v1371
    %v1380 = vadd.f32 %v1356, %v1372
    %v1381 = vadd.f32 %v1357, %v1373
    %v1382 = vadd.f32 %v1358, %v1374
    %v1383 = vadd.f32 %v1359, %v1375
    %v1384 = vadd.f32 %v1360, %v1376
    %v1385 = vadd.f32 %v1361, %v1377
    %v1386 = vadd.f32 %v1362, %v1378
    %v1387 = vadd.f32 %v1363, %v1379
    %v1388 = vlaneseq
    %v1389 = vshrl.u32 %v1388, 7
    %v1390 = vsub.s32 2, %v1389
    %v1391 = vrot.slane %v1338, %v1390
    %v1392 = vlaneseq
    %v1393 = vshrl.u32 %v1392, 7
    %v1394 = vsub.s32 2, %v1393
    %v1395 = vrot.slane %v1339, %v1394
    %v1396 = vmul.f32 %v434, %v1391
    %v1397 = vmul.f32 %v434, %v1395
    %v1398 = vmul.f32 %v438, %v1391
    %v1399 = vmul.f32 %v438, %v1395
    %v1400 = vmul.f32 %v442, %v1391
    %v1401 = vmul.f32 %v442, %v1395
    %v1402 = vmul.f32 %v446, %v1391
    %v1403 = vmul.f32 %v446, %v1395
    %v1404 = vadd.f32 %v1380, %v1396
    %v1405 = vadd.f32 %v1381, %v1397
    %v1406 = vadd.f32 %v1382, %v1398
    %v1407 = vadd.f32 %v1383, %v1399
    %v1408 = vadd.f32 %v1384, %v1400
    %v1409 = vadd.f32 %v1385, %v1401
    %v1410 = vadd.f32 %v1386, %v1402
    %v1411 = vadd.f32 %v1387, %v1403
    %v1412 = vlaneseq
    %v1413 = vshrl.u32 %v1412, 7
    %v1414 = vsub.s32 2, %v1413
    %v1415 = vrot.slane %v1346, %v1414
    %v1416 = vlaneseq
    %v1417 = vshrl.u32 %v1416, 7
    %v1418 = vsub.s32 2, %v1417
    %v1419 = vrot.slane %v1347, %v1418
    %v1420 = vmul.f32 %v450, %v1415
    %v1421 = vmul.f32 %v450, %v1419
    %v1422 = vmul.f32 %v454, %v1415
    %v1423 = vmul.f32 %v454, %v1419
    %v1424 = vmul.f32 %v458, %v1415
    %v1425 = vmul.f32 %v458, %v1419
    %v1426 = vmul.f32 %v462, %v1415
    %v1427 = vmul.f32 %v462, %v1419
    %v1428 = vadd.f32 %v1404, %v1420
    %v1429 = vadd.f32 %v1405, %v1421
    %v1430 = vadd.f32 %v1406, %v1422
    %v1431 = vadd.f32 %v1407, %v1423
    %v1432 = vadd.f32 %v1408, %v1424
    %v1433 = vadd.f32 %v1409, %v1425
    %v1434 = vadd.f32 %v1410, %v1426
    %v1435 = vadd.f32 %v1411, %v1427
    %v1436 = vadd.f32 %v1428, %v471
    %v1437 = vadd.f32 %v1429, %v471
    %v1438 = vadd.f32 %v1430, %v476
    %v1439 = vadd.f32 %v1431, %v476
    %v1440 = vadd.f32 %v1432, %v481
    %v1441 = vadd.f32 %v1433, %v481
    %v1442 = vadd.f32 %v1434, %v486
    %v1443 = vadd.f32 %v1435, %v486
    %v1444 = vmax.f32 %v1436, 0.0
    %v1445 = vmax.f32 %v1437, 0.0
    %v1446 = vmax.f32 %v1438, 0.0
    %v1447 = vmax.f32 %v1439, 0.0
    %v1448 = vmax.f32 %v1440, 0.0
    %v1449 = vmax.f32 %v1441, 0.0
    %v1450 = vmax.f32 %v1442, 0.0
    %v1451 = vmax.f32 %v1443, 0.0
    %1452 = vmatprep.subr.mxu0 %v1445
    %1453 = vmatpush1.msra.mxu0 %v1444
    %1454 = vmatprep.subr.mxu0 %v1447
    %1455 = vmatpush1.msra.mxu0 %v1446
    %1456 = vmatprep.subr.mxu0 %v1449
    %1457 = vmatpush1.msra.mxu0 %v1448
    %1458 = vmatprep.subr.mxu0 %v1451
    %1459 = vmatpush1.msra.mxu0 %v1450
    %1460 = vmatprep.subr.mxu0 0.0
    %1461 = vmatpush1.msra.mxu0 0.0
    %1462 = vmatprep.subr.mxu0 0.0
    %1463 = vmatpush1.msra.mxu0 0.0
    %1464 = vmatprep.subr.mxu0 0.0
    %1465 = vmatpush1.msra.mxu0 0.0
    %1466 = vmatprep.subr.mxu0 0.0
    %1467 = vmatpush1.msra.mxu0 0.0
    %1468 = vmatprep.subr.mxu0 0.0
    %1469 = vmatpush1.msra.mxu0 0.0
    %1470 = vmatprep.subr.mxu0 0.0
    %1471 = vmatpush1.msra.mxu0 0.0
    %1472 = vmatprep.subr.mxu0 0.0
    %1473 = vmatpush1.msra.mxu0 0.0
    %1474 = vmatprep.subr.mxu0 0.0
    %1475 = vmatpush1.msra.mxu0 0.0
    %1476 = vmatprep.subr.mxu0 0.0
    %1477 = vmatpush1.msra.mxu0 0.0
    %1478 = vmatprep.subr.mxu0 0.0
    %1479 = vmatpush1.msra.mxu0 0.0
    %1480 = vmatprep.subr.mxu0 0.0
    %1481 = vmatpush1.msra.mxu0 0.0
    %1482 = vmatprep.subr.mxu0 0.0
    %1483 = vmatpush1.msra.mxu0 0.0
    %1484 = vmatprep.subr.mxu0 0.0
    %1485 = vmatpush1.msra.mxu0 0.0
    %1486 = vmatprep.subr.mxu0 0.0
    %1487 = vmatpush1.msra.mxu0 0.0
    %1488 = vmatprep.subr.mxu0 0.0
    %1489 = vmatpush1.msra.mxu0 0.0
    %1490 = vmatprep.subr.mxu0 0.0
    %1491 = vmatpush1.msra.mxu0 0.0
    %1492 = vmatprep.subr.mxu0 0.0
    %1493 = vmatpush1.msra.mxu0 0.0
    %1494 = vmatprep.subr.mxu0 0.0
    %1495 = vmatpush1.msra.mxu0 0.0
    %1496 = vmatprep.subr.mxu0 0.0
    %1497 = vmatpush1.msra.mxu0 0.0
    %1498 = vmatprep.subr.mxu0 0.0
    %1499 = vmatpush1.msra.mxu0 0.0
    %1500 = vmatprep.subr.mxu0 0.0
    %1501 = vmatpush1.msra.mxu0 0.0
    %1502 = vmatprep.subr.mxu0 0.0
    %1503 = vmatpush1.msra.mxu0 0.0
    %1504 = vmatprep.subr.mxu0 0.0
    %1505 = vmatpush1.msra.mxu0 0.0
    %1506 = vmatprep.subr.mxu0 0.0
    %1507 = vmatpush1.msra.mxu0 0.0
    %1508 = vmatprep.subr.mxu0 0.0
    %1509 = vmatpush1.msra.mxu0 0.0
    %1510 = vmatprep.subr.mxu0 0.0
    %1511 = vmatpush1.msra.mxu0 0.0
    %1512 = vmatprep.subr.mxu0 0.0
    %1513 = vmatpush1.msra.mxu0 0.0
    %1514 = vmatprep.subr.mxu0 0.0
    %1515 = vmatpush1.msra.mxu0 0.0
    %1516 = vmatprep.mubr.f32.mxu0 0.0
    %1517 = vmatmul.mubr.f32.gmra.mrb[0].mxu0 %v660
    %v1518 = vpop.f32.mrb[0].mxu0
    %v1519 = vadd.f32 %v495, %v1518
    %v1520 = vpop.f32.mrb[0].mxu0
    %v1521 = vadd.f32 %v495, %v1520
    %1522 = vmatprep.mubr.f32.mxu0 0.0
    %1523 = vmatmul.mubr.f32.gmra.mrb[0].mxu0 %v663
    %v1524 = vpop.f32.mrb[0].mxu0
    %v1525 = vadd.f32 %v500, %v1524
    %v1526 = vpop.f32.mrb[0].mxu0
    %v1527 = vadd.f32 %v500, %v1526
    %1528 = vmatprep.mubr.f32.mxu0 0.0
    %1529 = vmatmul.mubr.f32.gmra.mrb[0].mxu0 %v666
    %v1530 = vpop.f32.mrb[0].mxu0
    %v1531 = vadd.f32 %v505, %v1530
    %v1532 = vpop.f32.mrb[0].mxu0
    %v1533 = vadd.f32 %v505, %v1532
    %1534 = vmatprep.mubr.f32.mxu0 0.0
    %1535 = vmatmul.mubr.f32.gmra.mrb[0].mxu0 %v669
    %v1536 = vpop.f32.mrb[0].mxu0
    %v1537 = vadd.f32 %v510, %v1536
    %v1538 = vpop.f32.mrb[0].mxu0
    %v1539 = vadd.f32 %v510, %v1538
    %1540 = vdwg.mxu0
    %v1541 = vmax.f32 %v1519, 0.0
    %v1542 = vmax.f32 %v1521, 0.0
    %v1543 = vmax.f32 %v1525, 0.0
    %v1544 = vmax.f32 %v1527, 0.0
    %v1545 = vmax.f32 %v1531, 0.0
    %v1546 = vmax.f32 %v1533, 0.0
    %v1547 = vmax.f32 %v1537, 0.0
    %v1548 = vmax.f32 %v1539, 0.0
    %v1549 = vmul.f32 %v519, %v1541
    %v1550 = vmul.f32 %v519, %v1542
    %v1551 = vmul.f32 %v524, %v1543
    %v1552 = vmul.f32 %v524, %v1544
    %v1553 = vmul.f32 %v529, %v1545
    %v1554 = vmul.f32 %v529, %v1546
    %v1555 = vmul.f32 %v534, %v1547
    %v1556 = vmul.f32 %v534, %v1548
    %v1557 = vadd.f32 %v1549, %v1551
    %v1558 = vadd.f32 %v1557, %v1553
    %v1559 = vadd.f32 %v1558, %v1555
    %v1560 = vrot.slane %v1559, 4
    %v1561 = vadd.f32 %v1559, %v1560
    %v1562 = vrot.slane %v1561, 2
    %v1563 = vadd.f32 %v1561, %v1562
    %v1564 = vrot.slane %v1563, 1
    %v1565 = vadd.f32 %v1563, %v1564
    %v1566 = vadd.f32 %v1550, %v1552
    %v1567 = vadd.f32 %v1566, %v1554
    %v1568 = vadd.f32 %v1567, %v1556
    %v1569 = vrot.slane %v1568, 4
    %v1570 = vadd.f32 %v1568, %v1569
    %v1571 = vrot.slane %v1570, 2
    %v1572 = vadd.f32 %v1570, %v1571
    %v1573 = vrot.slane %v1572, 1
    %v1574 = vadd.f32 %v1572, %v1573
    %v1575 = vadd.f32 %v1565, %v545
    %v1576 = vadd.f32 %v1574, %v545
    %v1577 = vmul.f32 %v814, 2.0
    %v1578 = vmul.f32 %v815, 2.0
    %v1579 = vadd.f32 %v390, %v1577
    %v1580 = vadd.f32 %v391, %v1578
    %v1581 = vmul.f32 %v1077, 2.0
    %v1582 = vmul.f32 %v1078, 2.0
    %v1583 = vadd.f32 %v1579, %v1581
    %v1584 = vadd.f32 %v1580, %v1582
    %v1585 = vadd.f32 %v1583, %v1334
    %v1586 = vadd.f32 %v1584, %v1335
    %v1587 = vmul.f32 %v1585, 0.0016666667
    %v1588 = vmul.f32 %v1586, 0.0016666667
    %v1591 = vrot.slane %v1587, 1
    %v1592 = vrot.slane %v1588, 1
    %v1595 = vadd.f32 %v390, %v1591
    %v1596 = vadd.f32 %v391, %v1592
    %v1597 = vmul.f32 %v828, 2.0
    %v1598 = vmul.f32 %v829, 2.0
    %v1599 = vadd.f32 %v552, %v1597
    %v1600 = vadd.f32 %v553, %v1598
    %v1601 = vmul.f32 %v1085, 2.0
    %v1602 = vmul.f32 %v1086, 2.0
    %v1603 = vadd.f32 %v1599, %v1601
    %v1604 = vadd.f32 %v1600, %v1602
    %v1605 = vadd.f32 %v1603, %v1346
    %v1606 = vadd.f32 %v1604, %v1347
    %v1607 = vmul.f32 %v1605, 0.0016666667
    %v1608 = vmul.f32 %v1606, 0.0016666667
    %v1611 = vrot.slane %v1607, 1
    %v1612 = vrot.slane %v1608, 1
    %v1615 = vadd.f32 %v390, %v1611
    %v1616 = vadd.f32 %v391, %v1612
    %v1617 = vmul.f32 %v1057, 2.0
    %v1618 = vmul.f32 %v1058, 2.0
    %v1619 = vadd.f32 %v794, %v1617
    %v1620 = vadd.f32 %v795, %v1618
    %v1621 = vmul.f32 %v1314, 2.0
    %v1622 = vmul.f32 %v1315, 2.0
    %v1623 = vadd.f32 %v1619, %v1621
    %v1624 = vadd.f32 %v1620, %v1622
    %v1625 = vadd.f32 %v1623, %v1575
    %v1626 = vadd.f32 %v1624, %v1576
    %v1627 = vmul.f32 %v1625, 0.0016666667
    %v1628 = vmul.f32 %v1626, 0.0016666667
    %v1629 = vadd.f32 %v390, %v1627
    %v1630 = vadd.f32 %v391, %v1628
    %v1631 = vmul.f32 %v387, %v1595
    %v1632 = vmul.f32 %v389, %v1596
    %v1633 = vsub.f32 1.0, %v387
    %v1634 = vsub.f32 1.0, %v389
    %v1635 = vmul.f32 %v1633, %v41
    %v1636 = vmul.f32 %v1634, %v42
    %v1637 = vadd.f32 %v1631, %v1635
    %v1638 = vadd.f32 %v1632, %v1636
    %v1639 = vmul.f32 %v387, %v1615
    %v1640 = vmul.f32 %v389, %v1616
    %v1641 = vadd.f32 %v1639, %v1635
    %v1642 = vadd.f32 %v1640, %v1636
    %v1643 = vmul.f32 %v387, %v1629
    %v1644 = vmul.f32 %v389, %v1630
    %v1645 = vadd.f32 %v1643, %v1635
    %v1646 = vadd.f32 %v1644, %v1636
    %v1649 = vrot.slane %v383, 5
    %v1650 = vrot.slane %v385, 5
    %v1655 = vrot.slane %v387, 2
    %v1656 = vrot.slane %v389, 2
    %vm1659 = vcmask 1040384
    %v1660 = vsel %vm1659, %v1637, %v1641
    %v1661 = vsel %vm1659, %v1638, %v1642
    %vm1662 = vcmask 1041408
    %v1663 = vsel %vm1662, %v1660, %v1645
    %v1664 = vsel %vm1662, %v1661, %v1646
    %v1665 = vsel %vm134, %v1663, %v1649
    %v1666 = vsel %vm134, %v1664, %v1650
    %vm1667 = vcmask 1045504
    %v1668 = vsel %vm1667, %v1665, %v1655
    %v1669 = vsel %vm1667, %v1666, %v1656
    %1670 = vst [vmem:[#allocation3] sm:$0xff] %v1668
    %1671 = vst [vmem:[#allocation3 + $0x8] sm:$0xff] %v1669
    %1672 = vst [vmem:[#allocation3 + $0x10] sm:$0x1] %v1655
    %1673 = vst [vmem:[#allocation3 + $0x18] sm:$0x1] %v1656
    // Predicated region
    $region46: #{tpu_custom_call.1} parent=1 // pred_check
      _
    $region47: #{tpu_custom_call.1} parent=1 // pred_check_branch
      %1675 = sbr.rel (0) target = $region49
    $region48: #{tpu_custom_call.1} parent=1 // pred_region
      %s1677 = ssub.s32 512, 512
      %1678 = vsyncadd [#allocation4], %s1677
      %s1679 = sshll.u32 [#allocation3], 4
      %s1680 = int_to_ptr.vmem [resolvable:$true] %s1679
      %1685 = dma.vmem_to_hbm [thread:$0]  %s1680, 512, %s11, [#allocation4], 256, 256, 16
    $region49: #{tpu_custom_call.1} parent=1 // pred_fallthru
      _
    // Predicated region
    $region50: #{tpu_custom_call.1} parent=1 // pred_check
      _
    $region51: #{tpu_custom_call.1} parent=1 // pred_check_branch
      %1687 = sbr.rel (0) target = $region53
    $region52: #{tpu_custom_call.1} parent=1 // pred_region
      %1688 = dma.done [#allocation4], 512
    $region53: #{tpu_custom_call.1} parent=1 // pred_fallthru
      _
    %1689 = vsyncpa [#allocation4], 1

</llo_original>
